<compile_context>
chip_gen: v7x
topology: tpu7x:2x2x1
jax: 0.10.0
libtpu: 0.0.40
codegen_flags: <defaults>
</compile_context>

<pallas_src>
import jax
import jax.numpy as jnp
from jax.experimental import pallas as pl
from jax.experimental.pallas import tpu as pltpu

_TM = 256     # destination-row tile
_TK = 512     # source / contraction tile
_LANES = 128  # lane-pad for feature dims


def _round_up(v, m):
    return -(-v // m) * m


def _pad2d(a, rows, cols):
    return jnp.pad(a, ((0, rows - a.shape[0]), (0, cols - a.shape[1])))


def gcn_layer_kernel(a_ref, x_ref, dout_ref, din_ref, w_ref, b_ref,
                     o_ref, acc_ref):
    k = pl.program_id(1)

    @pl.when(k == 0)
    def _():
        acc_ref[...] = jnp.zeros_like(acc_ref)

    # Scale source features by out_deg^-1/2 (f32 scale), feed the MXU in bf16,
    # accumulate the 0/1-adjacency aggregation in f32.
    x_scaled = (x_ref[...].astype(jnp.float32) * dout_ref[...]).astype(jnp.bfloat16)
    acc_ref[...] += jnp.dot(a_ref[...], x_scaled,
                            preferred_element_type=jnp.float32)

    # Epilogue only on the last contraction step: dst-degree scaling, dense
    # transform, bias + ReLU, lane-dense store.
    @pl.when(k == pl.num_programs(1) - 1)
    def _():
        agg = acc_ref[...] * din_ref[...]
        h = jnp.dot(agg.astype(jnp.bfloat16), w_ref[...],
                    preferred_element_type=jnp.float32)
        o_ref[...] = jnp.maximum(h + b_ref[...], 0.0).astype(o_ref.dtype)


def gcn_layer(a, x, d_out_scale, d_in_scale, w, b, *, out_dtype,
              tm=_TM, tk=_TK):
    """One GraphConv(norm='both') + ReLU layer on padded inputs.

    a            : (N_pad, N_pad) bf16, raw 0/1 adjacency (dst rows, src cols)
    x            : (N_pad, F_in_pad) bf16 node features
    d_out_scale  : (N_pad, 1) f32, out_deg^-1/2 per source node
    d_in_scale   : (N_pad, 1) f32, in_deg^-1/2 per destination node
    w            : (F_in_pad, F_out_pad) bf16
    b            : (1, F_out_pad) f32
    """
    n_dst, n_src = a.shape
    f_in = x.shape[1]
    f_out = w.shape[1]
    grid = (n_dst // tm, n_src // tk)

    return pl.pallas_call(
        gcn_layer_kernel,
        out_shape=jax.ShapeDtypeStruct((n_dst, f_out), out_dtype),
        grid_spec=pltpu.PrefetchScalarGridSpec(
            num_scalar_prefetch=0,
            grid=grid,
            in_specs=[
                pl.BlockSpec((tm, tk), lambda i, k: (i, k)),        # A block
                pl.BlockSpec((tk, f_in), lambda i, k: (k, 0)),      # X block
                pl.BlockSpec((tk, 1), lambda i, k: (k, 0)),         # d_out^-1/2
                pl.BlockSpec((tm, 1), lambda i, k: (i, 0)),         # d_in^-1/2
                pl.BlockSpec((f_in, f_out), lambda i, k: (0, 0)),   # W
                pl.BlockSpec((1, f_out), lambda i, k: (0, 0)),      # b
            ],
            out_specs=pl.BlockSpec((tm, f_out), lambda i, k: (i, 0)),
            scratch_shapes=[pltpu.VMEM((tm, f_in), jnp.float32)],
        ),
        compiler_params=pltpu.CompilerParams(
            dimension_semantics=("parallel", "arbitrary"),
            vmem_limit_bytes=32 * 1024 * 1024,
        ),
    )(a, x, d_out_scale, d_in_scale, w, b)


def stochastic_two_layer_gcn(adj, x, params):
    """adj: (N, N) dense 0/1 adjacency (dst rows, src cols); x: (N, F_in)."""
    n, f_in = x.shape
    h_dim = params["w1"].shape[1]
    f_out = params["w2"].shape[1]

    n_pad = _round_up(n, max(_TM, _TK))
    f_in_p = _round_up(f_in, _LANES)
    h_p = _round_up(h_dim, _LANES)
    f_out_p = _round_up(f_out, _LANES)

    # DGL GraphConv norm='both': degrees clamped to >= 1; keep scales in f32.
    deg_out = jnp.clip(jnp.sum(adj, axis=0), 1.0)   # per source node (columns)
    deg_in = jnp.clip(jnp.sum(adj, axis=1), 1.0)    # per destination node (rows)
    d_out_scale = jnp.pad(deg_out ** -0.5, (0, n_pad - n),
                          constant_values=1.0).reshape(n_pad, 1).astype(jnp.float32)
    d_in_scale = jnp.pad(deg_in ** -0.5, (0, n_pad - n),
                         constant_values=1.0).reshape(n_pad, 1).astype(jnp.float32)

    # Raw 0/1 adjacency is exact in bf16; padded rows/cols are zero so they
    # contribute nothing and are sliced off at the end.
    a_p = _pad2d(adj, n_pad, n_pad).astype(jnp.bfloat16)
    x_p = _pad2d(x, n_pad, f_in_p).astype(jnp.bfloat16)

    w1 = _pad2d(params["w1"], f_in_p, h_p).astype(jnp.bfloat16)
    b1 = _pad2d(params["b1"], 1, h_p).astype(jnp.float32)
    w2 = _pad2d(params["w2"], h_p, f_out_p).astype(jnp.bfloat16)
    b2 = _pad2d(params["b2"], 1, f_out_p).astype(jnp.float32)

    # Layer 1 output stays bf16 (it is fed straight back into the MXU).
    h = gcn_layer(a_p, x_p, d_out_scale, d_in_scale, w1, b1,
                  out_dtype=jnp.bfloat16)
    out = gcn_layer(a_p, h, d_out_scale, d_in_scale, w2, b2,
                    out_dtype=jnp.float32)
    return out[:n, :f_out]


def glorot(key, shape):
    fan_in, fan_out = shape
    limit = (6.0 / (fan_in + fan_out)) ** 0.5
    return jax.random.uniform(key, shape, jnp.float32, -limit, limit)


def init_params(key, in_features, hidden_features, out_features):
    k1, k2 = jax.random.split(key)
    return {
        "w1": glorot(k1, (in_features, hidden_features)),
        "b1": jnp.zeros((1, hidden_features), jnp.float32),
        "w2": glorot(k2, (hidden_features, out_features)),
        "b2": jnp.zeros((1, out_features), jnp.float32),
    }


if __name__ == "__main__":
    key = jax.random.PRNGKey(0)
    k_adj, k_x, k_params = jax.random.split(key, 3)

    num_nodes = 16
    in_features, hidden_features, out_features = 8, 32, 16

    # Random directed graph as a dense adjacency matrix (N_dst, N_src).
    adj = jax.random.bernoulli(k_adj, p=0.3,
                               shape=(num_nodes, num_nodes)).astype(jnp.float32)
    x = jax.random.normal(k_x, (num_nodes, in_features), jnp.float32)
    params = init_params(k_params, in_features, hidden_features, out_features)

    out = stochastic_two_layer_gcn(adj, x, params)
    out = jax.block_until_ready(out)

    # Pure-JAX f32 reference.
    deg_out = jnp.clip(jnp.sum(adj, axis=0), 1.0)
    deg_in = jnp.clip(jnp.sum(adj, axis=1), 1.0)
    a_norm = adj * (deg_in ** -0.5)[:, None] * (deg_out ** -0.5)[None, :]
    h_ref = jnp.maximum(a_norm @ x @ params["w1"] + params["b1"], 0.0)
    o_ref = jnp.maximum(a_norm @ h_ref @ params["w2"] + params["b2"], 0.0)

    assert out.shape == (num_nodes, out_features)
    max_err = float(jnp.max(jnp.abs(out - o_ref)))
    assert jnp.allclose(out, o_ref, atol=5e-2, rtol=5e-2), max_err

    print("KERNEL_OK")
</pallas_src>

<mosaic_0001>
module attributes {stable_mosaic.version = 11 : i64} {
  func.func @gcn_layer_kernel(%arg0: i32, %arg1: i32, %arg2: memref<256x512xbf16, #tpu.memory_space<vmem>>, %arg3: memref<512x128xbf16, #tpu.memory_space<vmem>>, %arg4: memref<512x1xf32, #tpu.memory_space<vmem>>, %arg5: memref<256x1xf32, #tpu.memory_space<vmem>>, %arg6: memref<128x128xbf16, #tpu.memory_space<vmem>>, %arg7: memref<1x128xf32, #tpu.memory_space<vmem>>, %arg8: memref<256x128xbf16, #tpu.memory_space<vmem>>, %arg9: memref<256x128xf32, #tpu.memory_space<vmem>>) attributes {dimension_semantics = [#tpu.dimension_semantics<parallel>, #tpu.dimension_semantics<arbitrary>], iteration_bounds = array<i64: 2, 1>, scalar_prefetch = 0 : i64, scratch_operands = 1 : i64, tpu.core_type = #tpu.core_type<tc>, window_params = [{transform_indices = @transform_0, window_bounds = array<i64: 256, 512>}, {transform_indices = @transform_1, window_bounds = array<i64: 512, 128>}, {transform_indices = @transform_2, window_bounds = array<i64: 512, 1>}, {transform_indices = @transform_3, window_bounds = array<i64: 256, 1>}, {pipeline_mode = #tpu.pipeline_mode<synchronous>, transform_indices = @transform_4, window_bounds = array<i64: 128, 128>}, {pipeline_mode = #tpu.pipeline_mode<synchronous>, transform_indices = @transform_5, window_bounds = array<i64: 1, 128>}, {transform_indices = @transform_6, window_bounds = array<i64: 256, 128>}]} {
    %c0_i32 = arith.constant 0 : i32
    %0 = arith.cmpi eq, %arg1, %c0_i32 : i32
    %1 = arith.extui %0 : i1 to i32
    %c0_i32_0 = arith.constant 0 : i32
    %2 = arith.cmpi ne, %1, %c0_i32_0 : i32
    scf.if %2 {
      %cst_12 = arith.constant 0.000000e+00 : f32
      %17 = vector.broadcast %cst_12 : f32 to vector<256x128xf32>
      %c0_13 = arith.constant 0 : index
      %c0_14 = arith.constant 0 : index
      %18 = vector.load %arg9[%c0_13, %c0_14] : memref<256x128xf32, #tpu.memory_space<vmem>>, vector<256x128xf32>
      tpu.vector_store %arg9[%c0_13, %c0_14], %17 {strides = array<i32>} : memref<256x128xf32, #tpu.memory_space<vmem>>, vector<256x128xf32>,
    } else {
    }
    %c0 = arith.constant 0 : index
    %c0_1 = arith.constant 0 : index
    %3 = vector.load %arg3[%c0, %c0_1] : memref<512x128xbf16, #tpu.memory_space<vmem>>, vector<512x128xbf16>
    %4 = arith.extf %3 : vector<512x128xbf16> to vector<512x128xf32>
    %c0_2 = arith.constant 0 : index
    %c0_3 = arith.constant 0 : index
    %5 = vector.load %arg4[%c0_2, %c0_3] : memref<512x1xf32, #tpu.memory_space<vmem>>, vector<512x1xf32>
    %6 = vector.broadcast %5 : vector<512x1xf32> to vector<512x128xf32>
    %7 = arith.mulf %4, %6 : vector<512x128xf32>
    %8 = arith.truncf %7 : vector<512x128xf32> to vector<512x128xbf16>
    %c0_4 = arith.constant 0 : index
    %c0_5 = arith.constant 0 : index
    %9 = vector.load %arg9[%c0_4, %c0_5] : memref<256x128xf32, #tpu.memory_space<vmem>>, vector<256x128xf32>
    %c0_6 = arith.constant 0 : index
    %c0_7 = arith.constant 0 : index
    %10 = vector.load %arg2[%c0_6, %c0_7] : memref<256x512xbf16, #tpu.memory_space<vmem>>, vector<256x512xbf16>
    %cst = arith.constant dense<0.000000e+00> : vector<256x128xf32>
    %11 = tpu.matmul %10, %8, %cst {dimension_numbers = #tpu.dot_dimension_numbers<[1], [0], [0], [1], [0, 0, 1, 1], [], []>} : vector<256x512xbf16>, vector<512x128xbf16>, vector<256x128xf32> -> vector<256x128xf32>
    %12 = arith.addf %9, %11 : vector<256x128xf32>
    %c0_8 = arith.constant 0 : index
    %c0_9 = arith.constant 0 : index
    %13 = vector.load %arg9[%c0_8, %c0_9] : memref<256x128xf32, #tpu.memory_space<vmem>>, vector<256x128xf32>
    tpu.vector_store %arg9[%c0_8, %c0_9], %12 {strides = array<i32>} : memref<256x128xf32, #tpu.memory_space<vmem>>, vector<256x128xf32>,
    %c0_i32_10 = arith.constant 0 : i32
    %14 = arith.cmpi eq, %arg1, %c0_i32_10 : i32
    %15 = arith.extui %14 : i1 to i32
    %c0_i32_11 = arith.constant 0 : i32
    %16 = arith.cmpi ne, %15, %c0_i32_11 : i32
    scf.if %16 {
      %c0_12 = arith.constant 0 : index
      %c0_13 = arith.constant 0 : index
      %17 = vector.load %arg9[%c0_12, %c0_13] : memref<256x128xf32, #tpu.memory_space<vmem>>, vector<256x128xf32>
      %c0_14 = arith.constant 0 : index
      %c0_15 = arith.constant 0 : index
      %18 = vector.load %arg5[%c0_14, %c0_15] : memref<256x1xf32, #tpu.memory_space<vmem>>, vector<256x1xf32>
      %19 = vector.broadcast %18 : vector<256x1xf32> to vector<256x128xf32>
      %20 = arith.mulf %17, %19 : vector<256x128xf32>
      %21 = arith.truncf %20 : vector<256x128xf32> to vector<256x128xbf16>
      %c0_16 = arith.constant 0 : index
      %c0_17 = arith.constant 0 : index
      %22 = vector.load %arg6[%c0_16, %c0_17] : memref<128x128xbf16, #tpu.memory_space<vmem>>, vector<128x128xbf16>
      %cst_18 = arith.constant dense<0.000000e+00> : vector<256x128xf32>
      %23 = tpu.matmul %21, %22, %cst_18 {dimension_numbers = #tpu.dot_dimension_numbers<[1], [0], [0], [1], [0, 0, 1, 1], [], []>} : vector<256x128xbf16>, vector<128x128xbf16>, vector<256x128xf32> -> vector<256x128xf32>
      %c0_19 = arith.constant 0 : index
      %c0_20 = arith.constant 0 : index
      %24 = vector.load %arg7[%c0_19, %c0_20] : memref<1x128xf32, #tpu.memory_space<vmem>>, vector<1x128xf32>
      %25 = vector.broadcast %24 : vector<1x128xf32> to vector<256x128xf32>
      %26 = arith.addf %23, %25 : vector<256x128xf32>
      %cst_21 = arith.constant 0.000000e+00 : f32
      %27 = vector.broadcast %cst_21 : f32 to vector<256x128xf32>
      %28 = arith.maximumf %26, %27 : vector<256x128xf32>
      %29 = arith.truncf %28 : vector<256x128xf32> to vector<256x128xbf16>
      %c0_22 = arith.constant 0 : index
      %c0_23 = arith.constant 0 : index
      %30 = vector.load %arg8[%c0_22, %c0_23] : memref<256x128xbf16, #tpu.memory_space<vmem>>, vector<256x128xbf16>
      tpu.vector_store %arg8[%c0_22, %c0_23], %29 {strides = array<i32>} : memref<256x128xbf16, #tpu.memory_space<vmem>>, vector<256x128xbf16>,
    } else {
    }
    return
  }
  func.func @transform_0(%arg0: i32, %arg1: i32) -> (i32, i32) {
    %c0_i32 = arith.constant 0 : i32
    return %arg0, %arg1 : i32, i32
  }
  func.func @transform_1(%arg0: i32, %arg1: i32) -> (i32, i32) {
    %c0_i32 = arith.constant 0 : i32
    %c0_i32_0 = arith.constant 0 : i32
    return %arg1, %c0_i32 : i32, i32
  }
  func.func @transform_2(%arg0: i32, %arg1: i32) -> (i32, i32) {
    %c0_i32 = arith.constant 0 : i32
    %c0_i32_0 = arith.constant 0 : i32
    return %arg1, %c0_i32 : i32, i32
  }
  func.func @transform_3(%arg0: i32, %arg1: i32) -> (i32, i32) {
    %c0_i32 = arith.constant 0 : i32
    %c0_i32_0 = arith.constant 0 : i32
    return %arg0, %c0_i32 : i32, i32
  }
  func.func @transform_4(%arg0: i32, %arg1: i32) -> (i32, i32) {
    %c0_i32 = arith.constant 0 : i32
    %c0_i32_0 = arith.constant 0 : i32
    %c0_i32_1 = arith.constant 0 : i32
    return %c0_i32, %c0_i32_0 : i32, i32
  }
  func.func @transform_5(%arg0: i32, %arg1: i32) -> (i32, i32) {
    %c0_i32 = arith.constant 0 : i32
    %c0_i32_0 = arith.constant 0 : i32
    %c0_i32_1 = arith.constant 0 : i32
    return %c0_i32, %c0_i32_0 : i32, i32
  }
  func.func @transform_6(%arg0: i32, %arg1: i32) -> (i32, i32) {
    %c0_i32 = arith.constant 0 : i32
    %c0_i32_0 = arith.constant 0 : i32
    return %arg0, %c0_i32 : i32, i32
  }
}

</mosaic_0001>

<llo_original>
// kernel: tpu_custom_call.1
$region0: #{tpu_custom_call.1}
  #allocation0 [shape = 'u32[]', space=smem, size = 0x4, offset = 0x4, fixed_abs, tag = 'smem constant byte address 0x4 - core index']
  #allocation1 [shape = 'u32[144,128]{1,0:T(1,128)}', space=vmem, size = 0x12000, scoped, tag = 'internal scratch']
  #allocation2 [shape = 'f32[256,128]{1,0:T(8,128)}', space=vmem, size = 0x20000, scoped, tag = 'scratch operand']
  %s0 = inlined_call_operand.vmem [shape: bf16[512,512], index: 0, kind: input, shape index: {}]
  %s1 = inlined_call_operand.hbm [shape: bf16[512,128], index: 1, kind: input, shape index: {}]
  %s2 = inlined_call_operand.vmem [shape: f32[512,1], index: 2, kind: input, shape index: {}]
  %s3 = inlined_call_operand.vmem [shape: f32[512,1], index: 3, kind: input, shape index: {}]
  %s4 = inlined_call_operand.hbm [shape: bf16[128,128], index: 4, kind: input, shape index: {}]
  %s5 = inlined_call_operand.vmem [shape: f32[1,128], index: 5, kind: input, shape index: {}]
  %s6 = inlined_call_operand.hbm [shape: bf16[512,128], index: 6, kind: output, shape index: {}]
  %s7 = sld [smem:[#allocation0]]
  $region73: #{tpu_custom_call.1} parent=0
    _
  %s9 = ssub.s32 1, %s7
  %s10 = scalar_select 0, %s9, %s7
  $region1: #{tpu_custom_call.1} parent=0
    #allocation3 [shape = 'u8[131072]{0}', space=vmem, size = 0x20000, scoped, tag = 'input window, operand 1, single buffered']
    #allocation4 [shape = 's32[2]{0}', space=sflag, size = 0x8, scoped, tag = 'scoped memory for tpu_custom_call.1']
    #allocation5 [shape = 's32[2]{0}', space=sflag, size = 0x8, scoped, tag = 'scoped memory for tpu_custom_call.1']
    #allocation6 [shape = 'u8[32768]{0}', space=vmem, size = 0x8000, scoped, tag = 'input window, operand 4, single buffered']
    #allocation7 [shape = 's32[1]{0}', space=sflag, size = 0x4, scoped, tag = 'scoped memory for tpu_custom_call.1']
    #allocation8 [shape = 'u8[131072]{0}', space=vmem, size = 0x20000, scoped, tag = 'output window, operand 0']
    %11 = vsyncpa [#allocation4], 0
    %12 = vsyncpa [#allocation7], 0
    %13 = vsyncpa [#allocation5], 0
    %s14 = scalar_lea.sflag [#allocation5], 1
    %15 = vsyncpa %s14, 0
    loop: start=0, step=1, limit=4
    $region2: #{tpu_custom_call.1} parent=1 // loop_pre_header
      _
    $region3: #{tpu_custom_call.1} parent=1 // loop_header
      %s17 = sphi 0, %s21
      %p18 = scmp.ge.s32.totalorder %s17, 4
      %s24 = sphi 0, %s36
      %s25 = sphi 0, %s32
      %s26 = sphi 0, %s24
      %s27 = sphi 0, %s25
      %s28 = sphi 0, %s26
      %s29 = sphi 0, %s27
      %s41 = sphi 0, %s43
      %s44 = sphi 0, %s41
      %s45 = sphi 0, %s44
      %s61 = sphi 0, %s45
      %s67 = sphi 0, %s69
      %s70 = sphi 0, %s67
      %s71 = sphi 0, %s70
      %s87 = sphi 0, %s71
      %s93 = sphi 0, %s95
      %s96 = sphi 0, %s93
      %s97 = sphi 0, %s96
      %s113 = sphi 0, %s97
      %s119 = sphi 0, %s121
      %s122 = sphi 0, %s119
      %s123 = sphi 0, %s122
      %s139 = sphi 0, %s123
      %s143 = sphi 0, %s143
      %s145 = sphi 0, %s143
      %s146 = sphi 0, %s145
      %s160 = sphi 0, %s146
      %s164 = sphi 0, %s164
      %s166 = sphi 0, %s164
      %s167 = sphi 0, %s166
      %s181 = sphi 0, %s167
      %s187 = sphi 0, %s189
      %s190 = sphi 0, %s187
      %s191 = sphi 0, %s190
      %s207 = sphi 0, %s191
    $region4: #{tpu_custom_call.1} parent=1 // loop_header_branch
      %20 = sbr.rel (%p18) target = $region8
    $region5: #{tpu_custom_call.1} parent=1 // loop_body
      %s22 = ssub.s32 %s17, 1
      %s23 = ssub.s32 %s17, 2
      %s30 = sadd.s32 1, %s25
      %p31 = scmp.ge.s32.totalorder %s30, 1
      %s32 = scalar_select %p31, 0, %s30
      %s33 = sadd.s32 1, %s24
      %s34 = scalar_select %p31, %s33, %s24
      %p35 = scmp.ge.s32.totalorder %s34, 2
      %s36 = scalar_select %p35, 0, %s34
      %s37 = ssub.s32 %s24, %s36
      %s38 = ssub.s32 %s25, %s32
      %s39 = sor.u32 %s37, %s38
      %p40 = scmp.eq.s32.totalorder %s39, 0
      %s42 = sadd.s32 %s41, 1
      %s43 = scalar_select %p40, %s41, %s42
      %p46 = pneg %p40
      %p47 = scmp.eq.s32.totalorder %s17, 1
      %p48 = por %p46, %p47
      %p49 = scmp.ne.s32.totalorder %s41, %s44
      %p50 = scmp.eq.s32.totalorder %s17, 0
      %p51 = por %p49, %p50
      %p52 = scmp.ne.s32.totalorder %s41, %s44
      %p53 = scmp.eq.s32.totalorder %s22, 1
      %p54 = por %p52, %p53
      %p55 = scmp.ne.s32.totalorder %s44, %s45
      %p56 = scmp.eq.s32.totalorder %s22, 0
      %p57 = por %p55, %p56
      %p58 = scmp.ne.s32.totalorder %s44, %s45
      %p59 = scmp.eq.s32.totalorder %s23, 1
      %p60 = por %p58, %p59
      %p62 = scmp.ne.s32.totalorder %s45, %s61
      %p63 = scmp.eq.s32.totalorder %s23, 0
      %p64 = por %p62, %p63
      %s65 = ssub.s32 %s25, %s32
      %p66 = scmp.eq.s32.totalorder %s65, 0
      %s68 = sadd.s32 %s67, 1
      %s69 = scalar_select %p66, %s67, %s68
      %p72 = pneg %p66
      %p73 = scmp.eq.s32.totalorder %s17, 1
      %p74 = por %p72, %p73
      %p75 = scmp.ne.s32.totalorder %s67, %s70
      %p76 = scmp.eq.s32.totalorder %s17, 0
      %p77 = por %p75, %p76
      %p78 = scmp.ne.s32.totalorder %s67, %s70
      %p79 = scmp.eq.s32.totalorder %s22, 1
      %p80 = por %p78, %p79
      %p81 = scmp.ne.s32.totalorder %s70, %s71
      %p82 = scmp.eq.s32.totalorder %s22, 0
      %p83 = por %p81, %p82
      %p84 = scmp.ne.s32.totalorder %s70, %s71
      %p85 = scmp.eq.s32.totalorder %s23, 1
      %p86 = por %p84, %p85
      %p88 = scmp.ne.s32.totalorder %s71, %s87
      %p89 = scmp.eq.s32.totalorder %s23, 0
      %p90 = por %p88, %p89
      %s91 = ssub.s32 %s25, %s32
      %p92 = scmp.eq.s32.totalorder %s91, 0
      %s94 = sadd.s32 %s93, 1
      %s95 = scalar_select %p92, %s93, %s94
      %p98 = pneg %p92
      %p99 = scmp.eq.s32.totalorder %s17, 1
      %p100 = por %p98, %p99
      %p101 = scmp.ne.s32.totalorder %s93, %s96
      %p102 = scmp.eq.s32.totalorder %s17, 0
      %p103 = por %p101, %p102
      %p104 = scmp.ne.s32.totalorder %s93, %s96
      %p105 = scmp.eq.s32.totalorder %s22, 1
      %p106 = por %p104, %p105
      %p107 = scmp.ne.s32.totalorder %s96, %s97
      %p108 = scmp.eq.s32.totalorder %s22, 0
      %p109 = por %p107, %p108
      %p110 = scmp.ne.s32.totalorder %s96, %s97
      %p111 = scmp.eq.s32.totalorder %s23, 1
      %p112 = por %p110, %p111
      %p114 = scmp.ne.s32.totalorder %s97, %s113
      %p115 = scmp.eq.s32.totalorder %s23, 0
      %p116 = por %p114, %p115
      %s117 = ssub.s32 %s24, %s36
      %p118 = scmp.eq.s32.totalorder %s117, 0
      %s120 = sadd.s32 %s119, 1
      %s121 = scalar_select %p118, %s119, %s120
      %p124 = pneg %p118
      %p125 = scmp.eq.s32.totalorder %s17, 1
      %p126 = por %p124, %p125
      %p127 = scmp.ne.s32.totalorder %s119, %s122
      %p128 = scmp.eq.s32.totalorder %s17, 0
      %p129 = por %p127, %p128
      %p130 = scmp.ne.s32.totalorder %s119, %s122
      %p131 = scmp.eq.s32.totalorder %s22, 1
      %p132 = por %p130, %p131
      %p133 = scmp.ne.s32.totalorder %s122, %s123
      %p134 = scmp.eq.s32.totalorder %s22, 0
      %p135 = por %p133, %p134
      %p136 = scmp.ne.s32.totalorder %s122, %s123
      %p137 = scmp.eq.s32.totalorder %s23, 1
      %p138 = por %p136, %p137
      %p140 = scmp.ne.s32.totalorder %s123, %s139
      %p141 = scmp.eq.s32.totalorder %s23, 0
      %p142 = por %p140, %p141
      %s144 = sadd.s32 %s143, 1
      %p147 = scmp.eq.s32.totalorder %s17, 1
      %p148 = scmp.ne.s32.totalorder %s143, %s145
      %p149 = scmp.eq.s32.totalorder %s17, 0
      %p150 = por %p148, %p149
      %p151 = scmp.ne.s32.totalorder %s143, %s145
      %p152 = scmp.eq.s32.totalorder %s22, 1
      %p153 = por %p151, %p152
      %p154 = scmp.ne.s32.totalorder %s145, %s146
      %p155 = scmp.eq.s32.totalorder %s22, 0
      %p156 = por %p154, %p155
      %p157 = scmp.ne.s32.totalorder %s145, %s146
      %p158 = scmp.eq.s32.totalorder %s23, 1
      %p159 = por %p157, %p158
      %p161 = scmp.ne.s32.totalorder %s146, %s160
      %p162 = scmp.eq.s32.totalorder %s23, 0
      %p163 = por %p161, %p162
      %s165 = sadd.s32 %s164, 1
      %p168 = scmp.eq.s32.totalorder %s17, 1
      %p169 = scmp.ne.s32.totalorder %s164, %s166
      %p170 = scmp.eq.s32.totalorder %s17, 0
      %p171 = por %p169, %p170
      %p172 = scmp.ne.s32.totalorder %s164, %s166
      %p173 = scmp.eq.s32.totalorder %s22, 1
      %p174 = por %p172, %p173
      %p175 = scmp.ne.s32.totalorder %s166, %s167
      %p176 = scmp.eq.s32.totalorder %s22, 0
      %p177 = por %p175, %p176
      %p178 = scmp.ne.s32.totalorder %s166, %s167
      %p179 = scmp.eq.s32.totalorder %s23, 1
      %p180 = por %p178, %p179
      %p182 = scmp.ne.s32.totalorder %s167, %s181
      %p183 = scmp.eq.s32.totalorder %s23, 0
      %p184 = por %p182, %p183
      %s185 = ssub.s32 %s24, %s36
      %p186 = scmp.eq.s32.totalorder %s185, 0
      %s188 = sadd.s32 %s187, 1
      %s189 = scalar_select %p186, %s187, %s188
      %p192 = pneg %p186
      %p193 = scmp.eq.s32.totalorder %s17, 1
      %p194 = por %p192, %p193
      %p195 = scmp.ne.s32.totalorder %s187, %s190
      %p196 = scmp.eq.s32.totalorder %s17, 0
      %p197 = por %p195, %p196
      %p198 = scmp.ne.s32.totalorder %s187, %s190
      %p199 = scmp.eq.s32.totalorder %s22, 1
      %p200 = por %p198, %p199
      %p201 = scmp.ne.s32.totalorder %s190, %s191
      %p202 = scmp.eq.s32.totalorder %s22, 0
      %p203 = por %p201, %p202
      %p204 = scmp.ne.s32.totalorder %s190, %s191
      %p205 = scmp.eq.s32.totalorder %s23, 1
      %p206 = por %p204, %p205
      %p208 = scmp.ne.s32.totalorder %s191, %s207
      %p209 = scmp.eq.s32.totalorder %s23, 0
      %p210 = por %p208, %p209
      %p211 = scmp.le.s32.totalorder 1, %s17
      %p212 = scmp.lt.s32.totalorder %s17, 3
      %p213 = pnand %p211, %p212
      %p214 = pneg %p213
      // Predicated region
      $region9: #{tpu_custom_call.1} parent=5 // pred_check
        _
      $region10: #{tpu_custom_call.1} parent=5 // pred_check_branch
        %216 = sbr.rel (%p213) target = $region12
      $region11: #{tpu_custom_call.1} parent=5 // pred_region
        %s217 = ssub.s32 %s17, 1
        // Predicated region
        $region13: #{tpu_custom_call.1} parent=11 // pred_check
          %p218 = pneg %p83
        $region14: #{tpu_custom_call.1} parent=11 // pred_check_branch
          %220 = sbr.rel (%p218) target = $region16
        $region15: #{tpu_custom_call.1} parent=11 // pred_region
          %s221 = smul.u32 64, %s27
          %s223 = ssub.s32 4096, 4096
          %224 = vsyncadd [#allocation4], %s223
          %s225 = smul.addr %s221, 64
          %s226 = scalar_lea.hbm %s1, %s225
          %s227 = sshll.u32 [#allocation3], 4
          %s228 = int_to_ptr.vmem [resolvable:$true] %s227
          %233 = dma.hbm_to_vmem [thread:$0]  %s226, 4096, %s228, [#allocation4], 64, 64, 4
        $region16: #{tpu_custom_call.1} parent=11 // pred_fallthru
          _
        // Predicated region
        $region17: #{tpu_custom_call.1} parent=11 // pred_check
          %p234 = pneg %p109
        $region18: #{tpu_custom_call.1} parent=11 // pred_check_branch
          %236 = sbr.rel (%p234) target = $region20
        $region19: #{tpu_custom_call.1} parent=11 // pred_region
          %s237 = smul.u32 64, %s27
          %p238 = scmp.lt.s32.totalorder %s237, 63
          %s239 = scalar_select %p238, %s237, 63
          %s240 = smul.addr %s239, 8
          %s241 = scalar_lea.vmem %s2, %s240
          %s242 = smul.u32 64, %s27
        $region20: #{tpu_custom_call.1} parent=11 // pred_fallthru
          _
        // Predicated region
        $region21: #{tpu_custom_call.1} parent=11 // pred_check
          %p243 = pneg %p156
        $region22: #{tpu_custom_call.1} parent=11 // pred_check_branch
          %245 = sbr.rel (%p243) target = $region24
        $region23: #{tpu_custom_call.1} parent=11 // pred_region
          %s247 = ssub.s32 1024, 1024
          %248 = vsyncadd [#allocation7], %s247
          %s249 = sshll.u32 [#allocation6], 4
          %s250 = int_to_ptr.vmem [resolvable:$true] %s249
          %255 = dma.hbm_to_vmem [thread:$0]  %s4, 1024, %s250, [#allocation7], 64, 64, 4
        $region24: #{tpu_custom_call.1} parent=11 // pred_fallthru
          _
        // Predicated region
        $region25: #{tpu_custom_call.1} parent=11 // pred_check
          %p256 = pneg %p177
        $region26: #{tpu_custom_call.1} parent=11 // pred_check_branch
          %258 = sbr.rel (%p256) target = $region28
        $region27: #{tpu_custom_call.1} parent=11 // pred_region
          _
        $region28: #{tpu_custom_call.1} parent=11 // pred_fallthru
          _
      $region12: #{tpu_custom_call.1} parent=5 // pred_fallthru
        _
      %p259 = scmp.lt.s32.totalorder %s17, 2
      // Predicated region
      $region29: #{tpu_custom_call.1} parent=5 // pred_check
        %p260 = pneg %p259
      $region30: #{tpu_custom_call.1} parent=5 // pred_check_branch
        %262 = sbr.rel (%p260) target = $region32
      $region31: #{tpu_custom_call.1} parent=5 // pred_region
        // Predicated region
        $region33: #{tpu_custom_call.1} parent=31 // pred_check
          %p263 = pneg %p51
        $region34: #{tpu_custom_call.1} parent=31 // pred_check_branch
          %265 = sbr.rel (%p263) target = $region36
        $region35: #{tpu_custom_call.1} parent=31 // pred_region
          %s266 = smul.u32 32, %s24
          %s267 = smul.u32 4, %s25
          %p268 = scmp.lt.s32.totalorder %s266, 63
          %s269 = scalar_select %p268, %s266, 63
          %p270 = scmp.lt.s32.totalorder %s267, 3
          %s271 = scalar_select %p270, %s267, 3
          %s272 = smul.addr %s269, 4
          %s273 = sadd.s32 %s271, %s272
          %s274 = smul.addr %s273, 4
          %s275 = scalar_lea.vmem %s0, %s274
          %s276 = smul.u32 32, %s24
          %s277 = smul.u32 4, %s25
        $region36: #{tpu_custom_call.1} parent=31 // pred_fallthru
          _
        // Predicated region
        $region37: #{tpu_custom_call.1} parent=31 // pred_check
          %p278 = pneg %p129
        $region38: #{tpu_custom_call.1} parent=31 // pred_check_branch
          %280 = sbr.rel (%p278) target = $region40
        $region39: #{tpu_custom_call.1} parent=31 // pred_region
          %s281 = smul.u32 32, %s24
          %p282 = scmp.lt.s32.totalorder %s281, 63
          %s283 = scalar_select %p282, %s281, 63
          %s284 = smul.addr %s283, 8
          %s285 = scalar_lea.vmem %s3, %s284
          %s286 = smul.u32 32, %s24
        $region40: #{tpu_custom_call.1} parent=31 // pred_fallthru
          _
      $region32: #{tpu_custom_call.1} parent=5 // pred_fallthru
        _
      %p287 = scmp.le.s32.totalorder 1, %s17
      %p288 = scmp.lt.s32.totalorder %s17, 3
      %p289 = pnand %p287, %p288
      %p290 = pneg %p289
      // Predicated region
      $region41: #{tpu_custom_call.1} parent=5 // pred_check
        _
      $region42: #{tpu_custom_call.1} parent=5 // pred_check_branch
        %292 = sbr.rel (%p289) target = $region44
      $region43: #{tpu_custom_call.1} parent=5 // pred_region
        %s293 = ssub.s32 %s17, 1
        // Predicated region
        $region45: #{tpu_custom_call.1} parent=43 // pred_check
          %p294 = pneg %p83
        $region46: #{tpu_custom_call.1} parent=43 // pred_check_branch
          %296 = sbr.rel (%p294) target = $region48
        $region47: #{tpu_custom_call.1} parent=43 // pred_region
          %297 = dma.done [#allocation4], 4096
        $region48: #{tpu_custom_call.1} parent=43 // pred_fallthru
          _
        // Predicated region
        $region49: #{tpu_custom_call.1} parent=43 // pred_check
          %p298 = pneg %p156
        $region50: #{tpu_custom_call.1} parent=43 // pred_check_branch
          %300 = sbr.rel (%p298) target = $region52
        $region51: #{tpu_custom_call.1} parent=43 // pred_region
          %301 = dma.done [#allocation7], 1024
        $region52: #{tpu_custom_call.1} parent=43 // pred_fallthru
          _
        %s302 = smul.u32 32, %s26
        %s303 = smul.u32 4, %s27
        %p304 = scmp.lt.s32.totalorder %s302, 63
        %s305 = scalar_select %p304, %s302, 63
        %p306 = scmp.lt.s32.totalorder %s303, 3
        %s307 = scalar_select %p306, %s303, 3
        %s308 = smul.addr %s305, 4
        %s309 = sadd.s32 %s307, %s308
        %s310 = smul.addr %s309, 4
        %s311 = scalar_lea.vmem %s0, %s310
        %p312 = pneg %p57
        %p313 = pneg %p54
        %p314 = pneg %p83
        %p315 = pneg %p80
        %s316 = smul.u32 64, %s27
        %p317 = scmp.lt.s32.totalorder %s316, 63
        %s318 = scalar_select %p317, %s316, 63
        %s319 = smul.addr %s318, 8
        %s320 = scalar_lea.vmem %s2, %s319
        %p321 = pneg %p109
        %p322 = pneg %p106
        %s323 = smul.u32 32, %s26
        %p324 = scmp.lt.s32.totalorder %s323, 63
        %s325 = scalar_select %p324, %s323, 63
        %s326 = smul.addr %s325, 8
        %s327 = scalar_lea.vmem %s3, %s326
        %p328 = pneg %p135
        %p329 = pneg %p132
        %p330 = pneg %p156
        %p331 = pneg %p153
        %p332 = pneg %p177
        %p333 = pneg %p174
        %p334 = pneg %p203
        %p335 = pneg %p200
        %s336 = sand.u32 %s190, 1
        %s337 = scalar_lea.sflag [#allocation5], %s336
        %s338 = sand.u32 %s190, 1
        %s339 = smul.addr %s338, 128
        %s340 = scalar_lea.vmem [#allocation8], %s339
        %s341 = smul.u32 32, %s26
        %s342 = smul.u32 4, %s27
        %p343 = scmp.lt.s32.totalorder %s341, 63
        %s344 = scalar_select %p343, %s341, 63
        %p345 = scmp.lt.s32.totalorder %s342, 3
        %s346 = scalar_select %p345, %s342, 3
        %s347 = smul.addr %s344, 4
        %s348 = sadd.s32 %s346, %s347
        %s349 = smul.addr %s348, 4
        %s350 = scalar_lea.vmem %s0, %s349
        %s351 = smul.u32 32, %s26
        %s352 = smul.u32 4, %s27
        %s353 = smul.u32 64, %s27
        %s354 = smul.u32 64, %s27
        %p355 = scmp.lt.s32.totalorder %s354, 63
        %s356 = scalar_select %p355, %s354, 63
        %s357 = smul.addr %s356, 8
        %s358 = scalar_lea.vmem %s2, %s357
        %s359 = smul.u32 64, %s27
        %s360 = smul.u32 32, %s26
        %p361 = scmp.lt.s32.totalorder %s360, 63
        %s362 = scalar_select %p361, %s360, 63
        %s363 = smul.addr %s362, 8
        %s364 = scalar_lea.vmem %s3, %s363
        %s365 = smul.u32 32, %s26
        %s366 = smul.u32 32, %s26
        %p368 = scmp.eq.s32.totalorder %s27, 0
        // Predicated region
        $region53: #{tpu_custom_call.1} parent=43 // pred_check
          %p369 = pneg %p368
        $region54: #{tpu_custom_call.1} parent=43 // pred_check_branch
          %371 = sbr.rel (%p369) target = $region56
        $region55: #{tpu_custom_call.1} parent=43 // pred_region
          %372 = vst [vmem:[#allocation2] sm:$0xff] 0.0
          %373 = vst [vmem:[#allocation2 + $0x8] sm:$0xff] 0.0
          %374 = vst [vmem:[#allocation2 + $0x10] sm:$0xff] 0.0
          %375 = vst [vmem:[#allocation2 + $0x18] sm:$0xff] 0.0
          %376 = vst [vmem:[#allocation2 + $0x20] sm:$0xff] 0.0
          %377 = vst [vmem:[#allocation2 + $0x28] sm:$0xff] 0.0
          %378 = vst [vmem:[#allocation2 + $0x30] sm:$0xff] 0.0
          %379 = vst [vmem:[#allocation2 + $0x38] sm:$0xff] 0.0
          %380 = vst [vmem:[#allocation2 + $0x40] sm:$0xff] 0.0
          %381 = vst [vmem:[#allocation2 + $0x48] sm:$0xff] 0.0
          %382 = vst [vmem:[#allocation2 + $0x50] sm:$0xff] 0.0
          %383 = vst [vmem:[#allocation2 + $0x58] sm:$0xff] 0.0
          %384 = vst [vmem:[#allocation2 + $0x60] sm:$0xff] 0.0
          %385 = vst [vmem:[#allocation2 + $0x68] sm:$0xff] 0.0
          %386 = vst [vmem:[#allocation2 + $0x70] sm:$0xff] 0.0
          %387 = vst [vmem:[#allocation2 + $0x78] sm:$0xff] 0.0
          %388 = vst [vmem:[#allocation2 + $0x80] sm:$0xff] 0.0
          %389 = vst [vmem:[#allocation2 + $0x88] sm:$0xff] 0.0
          %390 = vst [vmem:[#allocation2 + $0x90] sm:$0xff] 0.0
          %391 = vst [vmem:[#allocation2 + $0x98] sm:$0xff] 0.0
          %392 = vst [vmem:[#allocation2 + $0xa0] sm:$0xff] 0.0
          %393 = vst [vmem:[#allocation2 + $0xa8] sm:$0xff] 0.0
          %394 = vst [vmem:[#allocation2 + $0xb0] sm:$0xff] 0.0
          %395 = vst [vmem:[#allocation2 + $0xb8] sm:$0xff] 0.0
          %396 = vst [vmem:[#allocation2 + $0xc0] sm:$0xff] 0.0
          %397 = vst [vmem:[#allocation2 + $0xc8] sm:$0xff] 0.0
          %398 = vst [vmem:[#allocation2 + $0xd0] sm:$0xff] 0.0
          %399 = vst [vmem:[#allocation2 + $0xd8] sm:$0xff] 0.0
          %400 = vst [vmem:[#allocation2 + $0xe0] sm:$0xff] 0.0
          %401 = vst [vmem:[#allocation2 + $0xe8] sm:$0xff] 0.0
          %402 = vst [vmem:[#allocation2 + $0xf0] sm:$0xff] 0.0
          %403 = vst [vmem:[#allocation2 + $0xf8] sm:$0xff] 0.0
        $region56: #{tpu_custom_call.1} parent=43 // pred_fallthru
          _
        %v404 = vld [vmem:[#allocation3] sm:$0xf]
        %v405 = vld [vmem:[#allocation3 + $0x4] sm:$0xf]
        %v406 = vld [vmem:[#allocation3 + $0x8] sm:$0xf]
        %v407 = vld [vmem:[#allocation3 + $0xc] sm:$0xf]
        %v408 = vld [vmem:[#allocation3 + $0x10] sm:$0xf]
        %v409 = vld [vmem:[#allocation3 + $0x14] sm:$0xf]
        %v410 = vld [vmem:[#allocation3 + $0x18] sm:$0xf]
        %v411 = vld [vmem:[#allocation3 + $0x1c] sm:$0xf]
        %v412 = vld [vmem:[#allocation3 + $0x20] sm:$0xf]
        %v413 = vld [vmem:[#allocation3 + $0x24] sm:$0xf]
        %v414 = vld [vmem:[#allocation3 + $0x28] sm:$0xf]
        %v415 = vld [vmem:[#allocation3 + $0x2c] sm:$0xf]
        %v416 = vld [vmem:[#allocation3 + $0x30] sm:$0xf]
        %v417 = vld [vmem:[#allocation3 + $0x34] sm:$0xf]
        %v418 = vld [vmem:[#allocation3 + $0x38] sm:$0xf]
        %v419 = vld [vmem:[#allocation3 + $0x3c] sm:$0xf]
        %v420 = vld [vmem:[#allocation3 + $0x40] sm:$0xf]
        %v421 = vld [vmem:[#allocation3 + $0x44] sm:$0xf]
        %v422 = vld [vmem:[#allocation3 + $0x48] sm:$0xf]
        %v423 = vld [vmem:[#allocation3 + $0x4c] sm:$0xf]
        %v424 = vld [vmem:[#allocation3 + $0x50] sm:$0xf]
        %v425 = vld [vmem:[#allocation3 + $0x54] sm:$0xf]
        %v426 = vld [vmem:[#allocation3 + $0x58] sm:$0xf]
        %v427 = vld [vmem:[#allocation3 + $0x5c] sm:$0xf]
        %v428 = vld [vmem:[#allocation3 + $0x60] sm:$0xf]
        %v429 = vld [vmem:[#allocation3 + $0x64] sm:$0xf]
        %v430 = vld [vmem:[#allocation3 + $0x68] sm:$0xf]
        %v431 = vld [vmem:[#allocation3 + $0x6c] sm:$0xf]
        %v432 = vld [vmem:[#allocation3 + $0x70] sm:$0xf]
        %v433 = vld [vmem:[#allocation3 + $0x74] sm:$0xf]
        %v434 = vld [vmem:[#allocation3 + $0x78] sm:$0xf]
        %v435 = vld [vmem:[#allocation3 + $0x7c] sm:$0xf]
        %v436 = vld [vmem:[#allocation3 + $0x80] sm:$0xf]
        %v437 = vld [vmem:[#allocation3 + $0x84] sm:$0xf]
        %v438 = vld [vmem:[#allocation3 + $0x88] sm:$0xf]
        %v439 = vld [vmem:[#allocation3 + $0x8c] sm:$0xf]
        %v440 = vld [vmem:[#allocation3 + $0x90] sm:$0xf]
        %v441 = vld [vmem:[#allocation3 + $0x94] sm:$0xf]
        %v442 = vld [vmem:[#allocation3 + $0x98] sm:$0xf]
        %v443 = vld [vmem:[#allocation3 + $0x9c] sm:$0xf]
        %v444 = vld [vmem:[#allocation3 + $0xa0] sm:$0xf]
        %v445 = vld [vmem:[#allocation3 + $0xa4] sm:$0xf]
        %v446 = vld [vmem:[#allocation3 + $0xa8] sm:$0xf]
        %v447 = vld [vmem:[#allocation3 + $0xac] sm:$0xf]
        %v448 = vld [vmem:[#allocation3 + $0xb0] sm:$0xf]
        %v449 = vld [vmem:[#allocation3 + $0xb4] sm:$0xf]
        %v450 = vld [vmem:[#allocation3 + $0xb8] sm:$0xf]
        %v451 = vld [vmem:[#allocation3 + $0xbc] sm:$0xf]
        %v452 = vld [vmem:[#allocation3 + $0xc0] sm:$0xf]
        %v453 = vld [vmem:[#allocation3 + $0xc4] sm:$0xf]
        %v454 = vld [vmem:[#allocation3 + $0xc8] sm:$0xf]
        %v455 = vld [vmem:[#allocation3 + $0xcc] sm:$0xf]
        %v456 = vld [vmem:[#allocation3 + $0xd0] sm:$0xf]
        %v457 = vld [vmem:[#allocation3 + $0xd4] sm:$0xf]
        %v458 = vld [vmem:[#allocation3 + $0xd8] sm:$0xf]
        %v459 = vld [vmem:[#allocation3 + $0xdc] sm:$0xf]
        %v460 = vld [vmem:[#allocation3 + $0xe0] sm:$0xf]
        %v461 = vld [vmem:[#allocation3 + $0xe4] sm:$0xf]
        %v462 = vld [vmem:[#allocation3 + $0xe8] sm:$0xf]
        %v463 = vld [vmem:[#allocation3 + $0xec] sm:$0xf]
        %v464 = vld [vmem:[#allocation3 + $0xf0] sm:$0xf]
        %v465 = vld [vmem:[#allocation3 + $0xf4] sm:$0xf]
        %v466 = vld [vmem:[#allocation3 + $0xf8] sm:$0xf]
        %v467 = vld [vmem:[#allocation3 + $0xfc] sm:$0xf]
        %v468 = vunpack.c.l.bf16 %v404
        %v469 = vunpack.c.l.bf16 %v405
        %v470 = vunpack.c.l.bf16 %v406
        %v471 = vunpack.c.l.bf16 %v407
        %v472 = vunpack.c.l.bf16 %v408
        %v473 = vunpack.c.l.bf16 %v409
        %v474 = vunpack.c.l.bf16 %v410
        %v475 = vunpack.c.l.bf16 %v411
        %v476 = vunpack.c.l.bf16 %v412
        %v477 = vunpack.c.l.bf16 %v413
        %v478 = vunpack.c.l.bf16 %v414
        %v479 = vunpack.c.l.bf16 %v415
        %v480 = vunpack.c.l.bf16 %v416
        %v481 = vunpack.c.l.bf16 %v417
        %v482 = vunpack.c.l.bf16 %v418
        %v483 = vunpack.c.l.bf16 %v419
        %v484 = vunpack.c.l.bf16 %v420
        %v485 = vunpack.c.l.bf16 %v421
        %v486 = vunpack.c.l.bf16 %v422
        %v487 = vunpack.c.l.bf16 %v423
        %v488 = vunpack.c.l.bf16 %v424
        %v489 = vunpack.c.l.bf16 %v425
        %v490 = vunpack.c.l.bf16 %v426
        %v491 = vunpack.c.l.bf16 %v427
        %v492 = vunpack.c.l.bf16 %v428
        %v493 = vunpack.c.l.bf16 %v429
        %v494 = vunpack.c.l.bf16 %v430
        %v495 = vunpack.c.l.bf16 %v431
        %v496 = vunpack.c.l.bf16 %v432
        %v497 = vunpack.c.l.bf16 %v433
        %v498 = vunpack.c.l.bf16 %v434
        %v499 = vunpack.c.l.bf16 %v435
        %v500 = vunpack.c.l.bf16 %v436
        %v501 = vunpack.c.l.bf16 %v437
        %v502 = vunpack.c.l.bf16 %v438
        %v503 = vunpack.c.l.bf16 %v439
        %v504 = vunpack.c.l.bf16 %v440
        %v505 = vunpack.c.l.bf16 %v441
        %v506 = vunpack.c.l.bf16 %v442
        %v507 = vunpack.c.l.bf16 %v443
        %v508 = vunpack.c.l.bf16 %v444
        %v509 = vunpack.c.l.bf16 %v445
        %v510 = vunpack.c.l.bf16 %v446
        %v511 = vunpack.c.l.bf16 %v447
        %v512 = vunpack.c.l.bf16 %v448
        %v513 = vunpack.c.l.bf16 %v449
        %v514 = vunpack.c.l.bf16 %v450
        %v515 = vunpack.c.l.bf16 %v451
        %v516 = vunpack.c.l.bf16 %v452
        %v517 = vunpack.c.l.bf16 %v453
        %v518 = vunpack.c.l.bf16 %v454
        %v519 = vunpack.c.l.bf16 %v455
        %v520 = vunpack.c.l.bf16 %v456
        %v521 = vunpack.c.l.bf16 %v457
        %v522 = vunpack.c.l.bf16 %v458
        %v523 = vunpack.c.l.bf16 %v459
        %v524 = vunpack.c.l.bf16 %v460
        %v525 = vunpack.c.l.bf16 %v461
        %v526 = vunpack.c.l.bf16 %v462
        %v527 = vunpack.c.l.bf16 %v463
        %v528 = vunpack.c.l.bf16 %v464
        %v529 = vunpack.c.l.bf16 %v465
        %v530 = vunpack.c.l.bf16 %v466
        %v531 = vunpack.c.l.bf16 %v467
        %v532 = vld [vmem:[%s358] sm:$0xff]
        %v533 = vld [vmem:[%s358 + $0x8] sm:$0xff]
        %v534 = vld [vmem:[%s358 + $0x10] sm:$0xff]
        %v535 = vld [vmem:[%s358 + $0x18] sm:$0xff]
        %v536 = vld [vmem:[%s358 + $0x20] sm:$0xff]
        %v537 = vld [vmem:[%s358 + $0x28] sm:$0xff]
        %v538 = vld [vmem:[%s358 + $0x30] sm:$0xff]
        %v539 = vld [vmem:[%s358 + $0x38] sm:$0xff]
        %v540 = vld [vmem:[%s358 + $0x40] sm:$0xff]
        %v541 = vld [vmem:[%s358 + $0x48] sm:$0xff]
        %v542 = vld [vmem:[%s358 + $0x50] sm:$0xff]
        %v543 = vld [vmem:[%s358 + $0x58] sm:$0xff]
        %v544 = vld [vmem:[%s358 + $0x60] sm:$0xff]
        %v545 = vld [vmem:[%s358 + $0x68] sm:$0xff]
        %v546 = vld [vmem:[%s358 + $0x70] sm:$0xff]
        %v547 = vld [vmem:[%s358 + $0x78] sm:$0xff]
        %v548 = vld [vmem:[%s358 + $0x80] sm:$0xff]
        %v549 = vld [vmem:[%s358 + $0x88] sm:$0xff]
        %v550 = vld [vmem:[%s358 + $0x90] sm:$0xff]
        %v551 = vld [vmem:[%s358 + $0x98] sm:$0xff]
        %v552 = vld [vmem:[%s358 + $0xa0] sm:$0xff]
        %v553 = vld [vmem:[%s358 + $0xa8] sm:$0xff]
        %v554 = vld [vmem:[%s358 + $0xb0] sm:$0xff]
        %v555 = vld [vmem:[%s358 + $0xb8] sm:$0xff]
        %v556 = vld [vmem:[%s358 + $0xc0] sm:$0xff]
        %v557 = vld [vmem:[%s358 + $0xc8] sm:$0xff]
        %v558 = vld [vmem:[%s358 + $0xd0] sm:$0xff]
        %v559 = vld [vmem:[%s358 + $0xd8] sm:$0xff]
        %v560 = vld [vmem:[%s358 + $0xe0] sm:$0xff]
        %v561 = vld [vmem:[%s358 + $0xe8] sm:$0xff]
        %v562 = vld [vmem:[%s358 + $0xf0] sm:$0xff]
        %v563 = vld [vmem:[%s358 + $0xf8] sm:$0xff]
        %v564 = vld [vmem:[%s358 + $0x100] sm:$0xff]
        %v565 = vld [vmem:[%s358 + $0x108] sm:$0xff]
        %v566 = vld [vmem:[%s358 + $0x110] sm:$0xff]
        %v567 = vld [vmem:[%s358 + $0x118] sm:$0xff]
        %v568 = vld [vmem:[%s358 + $0x120] sm:$0xff]
        %v569 = vld [vmem:[%s358 + $0x128] sm:$0xff]
        %v570 = vld [vmem:[%s358 + $0x130] sm:$0xff]
        %v571 = vld [vmem:[%s358 + $0x138] sm:$0xff]
        %v572 = vld [vmem:[%s358 + $0x140] sm:$0xff]
        %v573 = vld [vmem:[%s358 + $0x148] sm:$0xff]
        %v574 = vld [vmem:[%s358 + $0x150] sm:$0xff]
        %v575 = vld [vmem:[%s358 + $0x158] sm:$0xff]
        %v576 = vld [vmem:[%s358 + $0x160] sm:$0xff]
        %v577 = vld [vmem:[%s358 + $0x168] sm:$0xff]
        %v578 = vld [vmem:[%s358 + $0x170] sm:$0xff]
        %v579 = vld [vmem:[%s358 + $0x178] sm:$0xff]
        %v580 = vld [vmem:[%s358 + $0x180] sm:$0xff]
        %v581 = vld [vmem:[%s358 + $0x188] sm:$0xff]
        %v582 = vld [vmem:[%s358 + $0x190] sm:$0xff]
        %v583 = vld [vmem:[%s358 + $0x198] sm:$0xff]
        %v584 = vld [vmem:[%s358 + $0x1a0] sm:$0xff]
        %v585 = vld [vmem:[%s358 + $0x1a8] sm:$0xff]
        %v586 = vld [vmem:[%s358 + $0x1b0] sm:$0xff]
        %v587 = vld [vmem:[%s358 + $0x1b8] sm:$0xff]
        %v588 = vld [vmem:[%s358 + $0x1c0] sm:$0xff]
        %v589 = vld [vmem:[%s358 + $0x1c8] sm:$0xff]
        %v590 = vld [vmem:[%s358 + $0x1d0] sm:$0xff]
        %v591 = vld [vmem:[%s358 + $0x1d8] sm:$0xff]
        %v592 = vld [vmem:[%s358 + $0x1e0] sm:$0xff]
        %v593 = vld [vmem:[%s358 + $0x1e8] sm:$0xff]
        %v594 = vld [vmem:[%s358 + $0x1f0] sm:$0xff]
        %v595 = vld [vmem:[%s358 + $0x1f8] sm:$0xff]
        %597 = vset.pattern.permute.xlu0 0
        %598 = vperm.xlu0 %597, %v532
        %v599 = vpop.permute.xlu0 %598
        %602 = vset.pattern.permute.xlu0 0
        %603 = vperm.xlu0 %602, %v533
        %v604 = vpop.permute.xlu0 %603
        %607 = vset.pattern.permute.xlu0 0
        %608 = vperm.xlu0 %607, %v534
        %v609 = vpop.permute.xlu0 %608
        %612 = vset.pattern.permute.xlu0 0
        %613 = vperm.xlu0 %612, %v535
        %v614 = vpop.permute.xlu0 %613
        %617 = vset.pattern.permute.xlu0 0
        %618 = vperm.xlu0 %617, %v536
        %v619 = vpop.permute.xlu0 %618
        %622 = vset.pattern.permute.xlu0 0
        %623 = vperm.xlu0 %622, %v537
        %v624 = vpop.permute.xlu0 %623
        %627 = vset.pattern.permute.xlu0 0
        %628 = vperm.xlu0 %627, %v538
        %v629 = vpop.permute.xlu0 %628
        %632 = vset.pattern.permute.xlu0 0
        %633 = vperm.xlu0 %632, %v539
        %v634 = vpop.permute.xlu0 %633
        %637 = vset.pattern.permute.xlu0 0
        %638 = vperm.xlu0 %637, %v540
        %v639 = vpop.permute.xlu0 %638
        %642 = vset.pattern.permute.xlu0 0
        %643 = vperm.xlu0 %642, %v541
        %v644 = vpop.permute.xlu0 %643
        %647 = vset.pattern.permute.xlu0 0
        %648 = vperm.xlu0 %647, %v542
        %v649 = vpop.permute.xlu0 %648
        %652 = vset.pattern.permute.xlu0 0
        %653 = vperm.xlu0 %652, %v543
        %v654 = vpop.permute.xlu0 %653
        %657 = vset.pattern.permute.xlu0 0
        %658 = vperm.xlu0 %657, %v544
        %v659 = vpop.permute.xlu0 %658
        %662 = vset.pattern.permute.xlu0 0
        %663 = vperm.xlu0 %662, %v545
        %v664 = vpop.permute.xlu0 %663
        %667 = vset.pattern.permute.xlu0 0
        %668 = vperm.xlu0 %667, %v546
        %v669 = vpop.permute.xlu0 %668
        %672 = vset.pattern.permute.xlu0 0
        %673 = vperm.xlu0 %672, %v547
        %v674 = vpop.permute.xlu0 %673
        %677 = vset.pattern.permute.xlu0 0
        %678 = vperm.xlu0 %677, %v548
        %v679 = vpop.permute.xlu0 %678
        %682 = vset.pattern.permute.xlu0 0
        %683 = vperm.xlu0 %682, %v549
        %v684 = vpop.permute.xlu0 %683
        %687 = vset.pattern.permute.xlu0 0
        %688 = vperm.xlu0 %687, %v550
        %v689 = vpop.permute.xlu0 %688
        %692 = vset.pattern.permute.xlu0 0
        %693 = vperm.xlu0 %692, %v551
        %v694 = vpop.permute.xlu0 %693
        %697 = vset.pattern.permute.xlu0 0
        %698 = vperm.xlu0 %697, %v552
        %v699 = vpop.permute.xlu0 %698
        %702 = vset.pattern.permute.xlu0 0
        %703 = vperm.xlu0 %702, %v553
        %v704 = vpop.permute.xlu0 %703
        %707 = vset.pattern.permute.xlu0 0
        %708 = vperm.xlu0 %707, %v554
        %v709 = vpop.permute.xlu0 %708
        %712 = vset.pattern.permute.xlu0 0
        %713 = vperm.xlu0 %712, %v555
        %v714 = vpop.permute.xlu0 %713
        %717 = vset.pattern.permute.xlu0 0
        %718 = vperm.xlu0 %717, %v556
        %v719 = vpop.permute.xlu0 %718
        %722 = vset.pattern.permute.xlu0 0
        %723 = vperm.xlu0 %722, %v557
        %v724 = vpop.permute.xlu0 %723
        %727 = vset.pattern.permute.xlu0 0
        %728 = vperm.xlu0 %727, %v558
        %v729 = vpop.permute.xlu0 %728
        %732 = vset.pattern.permute.xlu0 0
        %733 = vperm.xlu0 %732, %v559
        %v734 = vpop.permute.xlu0 %733
        %737 = vset.pattern.permute.xlu0 0
        %738 = vperm.xlu0 %737, %v560
        %v739 = vpop.permute.xlu0 %738
        %742 = vset.pattern.permute.xlu0 0
        %743 = vperm.xlu0 %742, %v561
        %v744 = vpop.permute.xlu0 %743
        %747 = vset.pattern.permute.xlu0 0
        %748 = vperm.xlu0 %747, %v562
        %v749 = vpop.permute.xlu0 %748
        %752 = vset.pattern.permute.xlu0 0
        %753 = vperm.xlu0 %752, %v563
        %v754 = vpop.permute.xlu0 %753
        %757 = vset.pattern.permute.xlu0 0
        %758 = vperm.xlu0 %757, %v564
        %v759 = vpop.permute.xlu0 %758
        %762 = vset.pattern.permute.xlu0 0
        %763 = vperm.xlu0 %762, %v565
        %v764 = vpop.permute.xlu0 %763
        %767 = vset.pattern.permute.xlu0 0
        %768 = vperm.xlu0 %767, %v566
        %v769 = vpop.permute.xlu0 %768
        %772 = vset.pattern.permute.xlu0 0
        %773 = vperm.xlu0 %772, %v567
        %v774 = vpop.permute.xlu0 %773
        %777 = vset.pattern.permute.xlu0 0
        %778 = vperm.xlu0 %777, %v568
        %v779 = vpop.permute.xlu0 %778
        %782 = vset.pattern.permute.xlu0 0
        %783 = vperm.xlu0 %782, %v569
        %v784 = vpop.permute.xlu0 %783
        %787 = vset.pattern.permute.xlu0 0
        %788 = vperm.xlu0 %787, %v570
        %v789 = vpop.permute.xlu0 %788
        %792 = vset.pattern.permute.xlu0 0
        %793 = vperm.xlu0 %792, %v571
        %v794 = vpop.permute.xlu0 %793
        %797 = vset.pattern.permute.xlu0 0
        %798 = vperm.xlu0 %797, %v572
        %v799 = vpop.permute.xlu0 %798
        %802 = vset.pattern.permute.xlu0 0
        %803 = vperm.xlu0 %802, %v573
        %v804 = vpop.permute.xlu0 %803
        %807 = vset.pattern.permute.xlu0 0
        %808 = vperm.xlu0 %807, %v574
        %v809 = vpop.permute.xlu0 %808
        %812 = vset.pattern.permute.xlu0 0
        %813 = vperm.xlu0 %812, %v575
        %v814 = vpop.permute.xlu0 %813
        %817 = vset.pattern.permute.xlu0 0
        %818 = vperm.xlu0 %817, %v576
        %v819 = vpop.permute.xlu0 %818
        %822 = vset.pattern.permute.xlu0 0
        %823 = vperm.xlu0 %822, %v577
        %v824 = vpop.permute.xlu0 %823
        %827 = vset.pattern.permute.xlu0 0
        %828 = vperm.xlu0 %827, %v578
        %v829 = vpop.permute.xlu0 %828
        %832 = vset.pattern.permute.xlu0 0
        %833 = vperm.xlu0 %832, %v579
        %v834 = vpop.permute.xlu0 %833
        %837 = vset.pattern.permute.xlu0 0
        %838 = vperm.xlu0 %837, %v580
        %v839 = vpop.permute.xlu0 %838
        %842 = vset.pattern.permute.xlu0 0
        %843 = vperm.xlu0 %842, %v581
        %v844 = vpop.permute.xlu0 %843
        %847 = vset.pattern.permute.xlu0 0
        %848 = vperm.xlu0 %847, %v582
        %v849 = vpop.permute.xlu0 %848
        %852 = vset.pattern.permute.xlu0 0
        %853 = vperm.xlu0 %852, %v583
        %v854 = vpop.permute.xlu0 %853
        %857 = vset.pattern.permute.xlu0 0
        %858 = vperm.xlu0 %857, %v584
        %v859 = vpop.permute.xlu0 %858
        %862 = vset.pattern.permute.xlu0 0
        %863 = vperm.xlu0 %862, %v585
        %v864 = vpop.permute.xlu0 %863
        %867 = vset.pattern.permute.xlu0 0
        %868 = vperm.xlu0 %867, %v586
        %v869 = vpop.permute.xlu0 %868
        %872 = vset.pattern.permute.xlu0 0
        %873 = vperm.xlu0 %872, %v587
        %v874 = vpop.permute.xlu0 %873
        %877 = vset.pattern.permute.xlu0 0
        %878 = vperm.xlu0 %877, %v588
        %v879 = vpop.permute.xlu0 %878
        %882 = vset.pattern.permute.xlu0 0
        %883 = vperm.xlu0 %882, %v589
        %v884 = vpop.permute.xlu0 %883
        %887 = vset.pattern.permute.xlu0 0
        %888 = vperm.xlu0 %887, %v590
        %v889 = vpop.permute.xlu0 %888
        %892 = vset.pattern.permute.xlu0 0
        %893 = vperm.xlu0 %892, %v591
        %v894 = vpop.permute.xlu0 %893
        %897 = vset.pattern.permute.xlu0 0
        %898 = vperm.xlu0 %897, %v592
        %v899 = vpop.permute.xlu0 %898
        %902 = vset.pattern.permute.xlu0 0
        %903 = vperm.xlu0 %902, %v593
        %v904 = vpop.permute.xlu0 %903
        %907 = vset.pattern.permute.xlu0 0
        %908 = vperm.xlu0 %907, %v594
        %v909 = vpop.permute.xlu0 %908
        %912 = vset.pattern.permute.xlu0 0
        %913 = vperm.xlu0 %912, %v595
        %v914 = vpop.permute.xlu0 %913
        %v916 = vmul.f32 %v468, %v599
        %v917 = vmul.f32 %v469, %v604
        %v918 = vmul.f32 %v470, %v609
        %v919 = vmul.f32 %v471, %v614
        %v920 = vmul.f32 %v472, %v619
        %v921 = vmul.f32 %v473, %v624
        %v922 = vmul.f32 %v474, %v629
        %v923 = vmul.f32 %v475, %v634
        %v924 = vmul.f32 %v476, %v639
        %v925 = vmul.f32 %v477, %v644
        %v926 = vmul.f32 %v478, %v649
        %v927 = vmul.f32 %v479, %v654
        %v928 = vmul.f32 %v480, %v659
        %v929 = vmul.f32 %v481, %v664
        %v930 = vmul.f32 %v482, %v669
        %v931 = vmul.f32 %v483, %v674
        %v932 = vmul.f32 %v484, %v679
        %v933 = vmul.f32 %v485, %v684
        %v934 = vmul.f32 %v486, %v689
        %v935 = vmul.f32 %v487, %v694
        %v936 = vmul.f32 %v488, %v699
        %v937 = vmul.f32 %v489, %v704
        %v938 = vmul.f32 %v490, %v709
        %v939 = vmul.f32 %v491, %v714
        %v940 = vmul.f32 %v492, %v719
        %v941 = vmul.f32 %v493, %v724
        %v942 = vmul.f32 %v494, %v729
        %v943 = vmul.f32 %v495, %v734
        %v944 = vmul.f32 %v496, %v739
        %v945 = vmul.f32 %v497, %v744
        %v946 = vmul.f32 %v498, %v749
        %v947 = vmul.f32 %v499, %v754
        %v948 = vmul.f32 %v500, %v759
        %v949 = vmul.f32 %v501, %v764
        %v950 = vmul.f32 %v502, %v769
        %v951 = vmul.f32 %v503, %v774
        %v952 = vmul.f32 %v504, %v779
        %v953 = vmul.f32 %v505, %v784
        %v954 = vmul.f32 %v506, %v789
        %v955 = vmul.f32 %v507, %v794
        %v956 = vmul.f32 %v508, %v799
        %v957 = vmul.f32 %v509, %v804
        %v958 = vmul.f32 %v510, %v809
        %v959 = vmul.f32 %v511, %v814
        %v960 = vmul.f32 %v512, %v819
        %v961 = vmul.f32 %v513, %v824
        %v962 = vmul.f32 %v514, %v829
        %v963 = vmul.f32 %v515, %v834
        %v964 = vmul.f32 %v516, %v839
        %v965 = vmul.f32 %v517, %v844
        %v966 = vmul.f32 %v518, %v849
        %v967 = vmul.f32 %v519, %v854
        %v968 = vmul.f32 %v520, %v859
        %v969 = vmul.f32 %v521, %v864
        %v970 = vmul.f32 %v522, %v869
        %v971 = vmul.f32 %v523, %v874
        %v972 = vmul.f32 %v524, %v879
        %v973 = vmul.f32 %v525, %v884
        %v974 = vmul.f32 %v526, %v889
        %v975 = vmul.f32 %v527, %v894
        %v976 = vmul.f32 %v528, %v899
        %v977 = vmul.f32 %v529, %v904
        %v978 = vmul.f32 %v530, %v909
        %v979 = vmul.f32 %v531, %v914
        %v980 = vpack.c.bf16 %v917, %v916
        %v981 = vpack.c.bf16 %v919, %v918
        %v982 = vpack.c.bf16 %v921, %v920
        %v983 = vpack.c.bf16 %v923, %v922
        %v984 = vpack.c.bf16 %v925, %v924
        %v985 = vpack.c.bf16 %v927, %v926
        %v986 = vpack.c.bf16 %v929, %v928
        %v987 = vpack.c.bf16 %v931, %v930
        %v988 = vpack.c.bf16 %v933, %v932
        %v989 = vpack.c.bf16 %v935, %v934
        %v990 = vpack.c.bf16 %v937, %v936
        %v991 = vpack.c.bf16 %v939, %v938
        %v992 = vpack.c.bf16 %v941, %v940
        %v993 = vpack.c.bf16 %v943, %v942
        %v994 = vpack.c.bf16 %v945, %v944
        %v995 = vpack.c.bf16 %v947, %v946
        %v996 = vpack.c.bf16 %v949, %v948
        %v997 = vpack.c.bf16 %v951, %v950
        %v998 = vpack.c.bf16 %v953, %v952
        %v999 = vpack.c.bf16 %v955, %v954
        %v1000 = vpack.c.bf16 %v957, %v956
        %v1001 = vpack.c.bf16 %v959, %v958
        %v1002 = vpack.c.bf16 %v961, %v960
        %v1003 = vpack.c.bf16 %v963, %v962
        %v1004 = vpack.c.bf16 %v965, %v964
        %v1005 = vpack.c.bf16 %v967, %v966
        %v1006 = vpack.c.bf16 %v969, %v968
        %v1007 = vpack.c.bf16 %v971, %v970
        %v1008 = vpack.c.bf16 %v973, %v972
        %v1009 = vpack.c.bf16 %v975, %v974
        %v1010 = vpack.c.bf16 %v977, %v976
        %v1011 = vpack.c.bf16 %v979, %v978
        %v1012 = vld [vmem:[#allocation2] sm:$0xff]
        %v1013 = vld [vmem:[#allocation2 + $0x8] sm:$0xff]
        %v1014 = vld [vmem:[#allocation2 + $0x10] sm:$0xff]
        %v1015 = vld [vmem:[#allocation2 + $0x18] sm:$0xff]
        %v1016 = vld [vmem:[#allocation2 + $0x20] sm:$0xff]
        %v1017 = vld [vmem:[#allocation2 + $0x28] sm:$0xff]
        %v1018 = vld [vmem:[#allocation2 + $0x30] sm:$0xff]
        %v1019 = vld [vmem:[#allocation2 + $0x38] sm:$0xff]
        %v1020 = vld [vmem:[#allocation2 + $0x40] sm:$0xff]
        %v1021 = vld [vmem:[#allocation2 + $0x48] sm:$0xff]
        %v1022 = vld [vmem:[#allocation2 + $0x50] sm:$0xff]
        %v1023 = vld [vmem:[#allocation2 + $0x58] sm:$0xff]
        %v1024 = vld [vmem:[#allocation2 + $0x60] sm:$0xff]
        %v1025 = vld [vmem:[#allocation2 + $0x68] sm:$0xff]
        %v1026 = vld [vmem:[#allocation2 + $0x70] sm:$0xff]
        %v1027 = vld [vmem:[#allocation2 + $0x78] sm:$0xff]
        %v1028 = vld [vmem:[#allocation2 + $0x80] sm:$0xff]
        %v1029 = vld [vmem:[#allocation2 + $0x88] sm:$0xff]
        %v1030 = vld [vmem:[#allocation2 + $0x90] sm:$0xff]
        %v1031 = vld [vmem:[#allocation2 + $0x98] sm:$0xff]
        %v1032 = vld [vmem:[#allocation2 + $0xa0] sm:$0xff]
        %v1033 = vld [vmem:[#allocation2 + $0xa8] sm:$0xff]
        %v1034 = vld [vmem:[#allocation2 + $0xb0] sm:$0xff]
        %v1035 = vld [vmem:[#allocation2 + $0xb8] sm:$0xff]
        %v1036 = vld [vmem:[#allocation2 + $0xc0] sm:$0xff]
        %v1037 = vld [vmem:[#allocation2 + $0xc8] sm:$0xff]
        %v1038 = vld [vmem:[#allocation2 + $0xd0] sm:$0xff]
        %v1039 = vld [vmem:[#allocation2 + $0xd8] sm:$0xff]
        %v1040 = vld [vmem:[#allocation2 + $0xe0] sm:$0xff]
        %v1041 = vld [vmem:[#allocation2 + $0xe8] sm:$0xff]
        %v1042 = vld [vmem:[#allocation2 + $0xf0] sm:$0xff]
        %v1043 = vld [vmem:[#allocation2 + $0xf8] sm:$0xff]
        %v1044 = vld [vmem:[%s350] sm:$0xff]
        %v1045 = vld [vmem:[%s350 + $0x8] sm:$0xff]
        %v1046 = vld [vmem:[%s350 + $0x10] sm:$0xff]
        %v1047 = vld [vmem:[%s350 + $0x18] sm:$0xff]
        %v1048 = vld [vmem:[%s350 + $0x20] sm:$0xff]
        %v1049 = vld [vmem:[%s350 + $0x28] sm:$0xff]
        %v1050 = vld [vmem:[%s350 + $0x30] sm:$0xff]
        %v1051 = vld [vmem:[%s350 + $0x38] sm:$0xff]
        %v1052 = vld [vmem:[%s350 + $0x40] sm:$0xff]
        %v1053 = vld [vmem:[%s350 + $0x48] sm:$0xff]
        %v1054 = vld [vmem:[%s350 + $0x50] sm:$0xff]
        %v1055 = vld [vmem:[%s350 + $0x58] sm:$0xff]
        %v1056 = vld [vmem:[%s350 + $0x60] sm:$0xff]
        %v1057 = vld [vmem:[%s350 + $0x68] sm:$0xff]
        %v1058 = vld [vmem:[%s350 + $0x70] sm:$0xff]
        %v1059 = vld [vmem:[%s350 + $0x78] sm:$0xff]
        %v1060 = vld [vmem:[%s350 + $0x80] sm:$0xff]
        %v1061 = vld [vmem:[%s350 + $0x88] sm:$0xff]
        %v1062 = vld [vmem:[%s350 + $0x90] sm:$0xff]
        %v1063 = vld [vmem:[%s350 + $0x98] sm:$0xff]
        %v1064 = vld [vmem:[%s350 + $0xa0] sm:$0xff]
        %v1065 = vld [vmem:[%s350 + $0xa8] sm:$0xff]
        %v1066 = vld [vmem:[%s350 + $0xb0] sm:$0xff]
        %v1067 = vld [vmem:[%s350 + $0xb8] sm:$0xff]
        %v1068 = vld [vmem:[%s350 + $0xc0] sm:$0xff]
        %v1069 = vld [vmem:[%s350 + $0xc8] sm:$0xff]
        %v1070 = vld [vmem:[%s350 + $0xd0] sm:$0xff]
        %v1071 = vld [vmem:[%s350 + $0xd8] sm:$0xff]
        %v1072 = vld [vmem:[%s350 + $0xe0] sm:$0xff]
        %v1073 = vld [vmem:[%s350 + $0xe8] sm:$0xff]
        %v1074 = vld [vmem:[%s350 + $0xf0] sm:$0xff]
        %v1075 = vld [vmem:[%s350 + $0xf8] sm:$0xff]
        %v1076 = vld [vmem:[%s350 + $0x100] sm:$0xff]
        %v1077 = vld [vmem:[%s350 + $0x108] sm:$0xff]
        %v1078 = vld [vmem:[%s350 + $0x110] sm:$0xff]
        %v1079 = vld [vmem:[%s350 + $0x118] sm:$0xff]
        %v1080 = vld [vmem:[%s350 + $0x120] sm:$0xff]
        %v1081 = vld [vmem:[%s350 + $0x128] sm:$0xff]
        %v1082 = vld [vmem:[%s350 + $0x130] sm:$0xff]
        %v1083 = vld [vmem:[%s350 + $0x138] sm:$0xff]
        %v1084 = vld [vmem:[%s350 + $0x140] sm:$0xff]
        %v1085 = vld [vmem:[%s350 + $0x148] sm:$0xff]
        %v1086 = vld [vmem:[%s350 + $0x150] sm:$0xff]
        %v1087 = vld [vmem:[%s350 + $0x158] sm:$0xff]
        %v1088 = vld [vmem:[%s350 + $0x160] sm:$0xff]
        %v1089 = vld [vmem:[%s350 + $0x168] sm:$0xff]
        %v1090 = vld [vmem:[%s350 + $0x170] sm:$0xff]
        %v1091 = vld [vmem:[%s350 + $0x178] sm:$0xff]
        %v1092 = vld [vmem:[%s350 + $0x180] sm:$0xff]
        %v1093 = vld [vmem:[%s350 + $0x188] sm:$0xff]
        %v1094 = vld [vmem:[%s350 + $0x190] sm:$0xff]
        %v1095 = vld [vmem:[%s350 + $0x198] sm:$0xff]
        %v1096 = vld [vmem:[%s350 + $0x1a0] sm:$0xff]
        %v1097 = vld [vmem:[%s350 + $0x1a8] sm:$0xff]
        %v1098 = vld [vmem:[%s350 + $0x1b0] sm:$0xff]
        %v1099 = vld [vmem:[%s350 + $0x1b8] sm:$0xff]
        %v1100 = vld [vmem:[%s350 + $0x1c0] sm:$0xff]
        %v1101 = vld [vmem:[%s350 + $0x1c8] sm:$0xff]
        %v1102 = vld [vmem:[%s350 + $0x1d0] sm:$0xff]
        %v1103 = vld [vmem:[%s350 + $0x1d8] sm:$0xff]
        %v1104 = vld [vmem:[%s350 + $0x1e0] sm:$0xff]
        %v1105 = vld [vmem:[%s350 + $0x1e8] sm:$0xff]
        %v1106 = vld [vmem:[%s350 + $0x1f0] sm:$0xff]
        %v1107 = vld [vmem:[%s350 + $0x1f8] sm:$0xff]
        %v1172 = vunpack.c.l.b16 %v1044
        %v1173 = vunpack.c.h.b16 %v1044
        %v1174 = vunpack.c.l.b16 %v1045
        %v1175 = vunpack.c.h.b16 %v1045
        %v1176 = vunpack.c.l.b16 %v1046
        %v1177 = vunpack.c.h.b16 %v1046
        %v1178 = vunpack.c.l.b16 %v1047
        %v1179 = vunpack.c.h.b16 %v1047
        %v1180 = vunpack.c.l.b16 %v1048
        %v1181 = vunpack.c.h.b16 %v1048
        %v1182 = vunpack.c.l.b16 %v1049
        %v1183 = vunpack.c.h.b16 %v1049
        %v1184 = vunpack.c.l.b16 %v1050
        %v1185 = vunpack.c.h.b16 %v1050
        %v1186 = vunpack.c.l.b16 %v1051
        %v1187 = vunpack.c.h.b16 %v1051
        %v1188 = vunpack.c.l.b16 %v1052
        %v1189 = vunpack.c.h.b16 %v1052
        %v1190 = vunpack.c.l.b16 %v1053
        %v1191 = vunpack.c.h.b16 %v1053
        %v1192 = vunpack.c.l.b16 %v1054
        %v1193 = vunpack.c.h.b16 %v1054
        %v1194 = vunpack.c.l.b16 %v1055
        %v1195 = vunpack.c.h.b16 %v1055
        %v1196 = vunpack.c.l.b16 %v1056
        %v1197 = vunpack.c.h.b16 %v1056
        %v1198 = vunpack.c.l.b16 %v1057
        %v1199 = vunpack.c.h.b16 %v1057
        %v1200 = vunpack.c.l.b16 %v1058
        %v1201 = vunpack.c.h.b16 %v1058
        %v1202 = vunpack.c.l.b16 %v1059
        %v1203 = vunpack.c.h.b16 %v1059
        %v1204 = vunpack.c.l.b16 %v1060
        %v1205 = vunpack.c.h.b16 %v1060
        %v1206 = vunpack.c.l.b16 %v1061
        %v1207 = vunpack.c.h.b16 %v1061
        %v1208 = vunpack.c.l.b16 %v1062
        %v1209 = vunpack.c.h.b16 %v1062
        %v1210 = vunpack.c.l.b16 %v1063
        %v1211 = vunpack.c.h.b16 %v1063
        %v1212 = vunpack.c.l.b16 %v1064
        %v1213 = vunpack.c.h.b16 %v1064
        %v1214 = vunpack.c.l.b16 %v1065
        %v1215 = vunpack.c.h.b16 %v1065
        %v1216 = vunpack.c.l.b16 %v1066
        %v1217 = vunpack.c.h.b16 %v1066
        %v1218 = vunpack.c.l.b16 %v1067
        %v1219 = vunpack.c.h.b16 %v1067
        %v1220 = vunpack.c.l.b16 %v1068
        %v1221 = vunpack.c.h.b16 %v1068
        %v1222 = vunpack.c.l.b16 %v1069
        %v1223 = vunpack.c.h.b16 %v1069
        %v1224 = vunpack.c.l.b16 %v1070
        %v1225 = vunpack.c.h.b16 %v1070
        %v1226 = vunpack.c.l.b16 %v1071
        %v1227 = vunpack.c.h.b16 %v1071
        %v1228 = vunpack.c.l.b16 %v1072
        %v1229 = vunpack.c.h.b16 %v1072
        %v1230 = vunpack.c.l.b16 %v1073
        %v1231 = vunpack.c.h.b16 %v1073
        %v1232 = vunpack.c.l.b16 %v1074
        %v1233 = vunpack.c.h.b16 %v1074
        %v1234 = vunpack.c.l.b16 %v1075
        %v1235 = vunpack.c.h.b16 %v1075
        %v1236 = vunpack.c.l.b16 %v1076
        %v1237 = vunpack.c.h.b16 %v1076
        %v1238 = vunpack.c.l.b16 %v1077
        %v1239 = vunpack.c.h.b16 %v1077
        %v1240 = vunpack.c.l.b16 %v1078
        %v1241 = vunpack.c.h.b16 %v1078
        %v1242 = vunpack.c.l.b16 %v1079
        %v1243 = vunpack.c.h.b16 %v1079
        %v1244 = vunpack.c.l.b16 %v1080
        %v1245 = vunpack.c.h.b16 %v1080
        %v1246 = vunpack.c.l.b16 %v1081
        %v1247 = vunpack.c.h.b16 %v1081
        %v1248 = vunpack.c.l.b16 %v1082
        %v1249 = vunpack.c.h.b16 %v1082
        %v1250 = vunpack.c.l.b16 %v1083
        %v1251 = vunpack.c.h.b16 %v1083
        %v1252 = vunpack.c.l.b16 %v1084
        %v1253 = vunpack.c.h.b16 %v1084
        %v1254 = vunpack.c.l.b16 %v1085
        %v1255 = vunpack.c.h.b16 %v1085
        %v1256 = vunpack.c.l.b16 %v1086
        %v1257 = vunpack.c.h.b16 %v1086
        %v1258 = vunpack.c.l.b16 %v1087
        %v1259 = vunpack.c.h.b16 %v1087
        %v1260 = vunpack.c.l.b16 %v1088
        %v1261 = vunpack.c.h.b16 %v1088
        %v1262 = vunpack.c.l.b16 %v1089
        %v1263 = vunpack.c.h.b16 %v1089
        %v1264 = vunpack.c.l.b16 %v1090
        %v1265 = vunpack.c.h.b16 %v1090
        %v1266 = vunpack.c.l.b16 %v1091
        %v1267 = vunpack.c.h.b16 %v1091
        %v1268 = vunpack.c.l.b16 %v1092
        %v1269 = vunpack.c.h.b16 %v1092
        %v1270 = vunpack.c.l.b16 %v1093
        %v1271 = vunpack.c.h.b16 %v1093
        %v1272 = vunpack.c.l.b16 %v1094
        %v1273 = vunpack.c.h.b16 %v1094
        %v1274 = vunpack.c.l.b16 %v1095
        %v1275 = vunpack.c.h.b16 %v1095
        %v1276 = vunpack.c.l.b16 %v1096
        %v1277 = vunpack.c.h.b16 %v1096
        %v1278 = vunpack.c.l.b16 %v1097
        %v1279 = vunpack.c.h.b16 %v1097
        %v1280 = vunpack.c.l.b16 %v1098
        %v1281 = vunpack.c.h.b16 %v1098
        %v1282 = vunpack.c.l.b16 %v1099
        %v1283 = vunpack.c.h.b16 %v1099
        %v1284 = vunpack.c.l.b16 %v1100
        %v1285 = vunpack.c.h.b16 %v1100
        %v1286 = vunpack.c.l.b16 %v1101
        %v1287 = vunpack.c.h.b16 %v1101
        %v1288 = vunpack.c.l.b16 %v1102
        %v1289 = vunpack.c.h.b16 %v1102
        %v1290 = vunpack.c.l.b16 %v1103
        %v1291 = vunpack.c.h.b16 %v1103
        %v1292 = vunpack.c.l.b16 %v1104
        %v1293 = vunpack.c.h.b16 %v1104
        %v1294 = vunpack.c.l.b16 %v1105
        %v1295 = vunpack.c.h.b16 %v1105
        %v1296 = vunpack.c.l.b16 %v1106
        %v1297 = vunpack.c.h.b16 %v1106
        %v1298 = vunpack.c.l.b16 %v1107
        %v1299 = vunpack.c.h.b16 %v1107
        %v1300 = vpack.c.b16 %v1176, %v1172
        %v1301 = vpack.c.b16 %v1177, %v1173
        %v1302 = vpack.c.b16 %v1178, %v1174
        %v1303 = vpack.c.b16 %v1179, %v1175
        %v1304 = vpack.c.b16 %v1184, %v1180
        %v1305 = vpack.c.b16 %v1185, %v1181
        %v1306 = vpack.c.b16 %v1186, %v1182
        %v1307 = vpack.c.b16 %v1187, %v1183
        %v1308 = vpack.c.b16 %v1192, %v1188
        %v1309 = vpack.c.b16 %v1193, %v1189
        %v1310 = vpack.c.b16 %v1194, %v1190
        %v1311 = vpack.c.b16 %v1195, %v1191
        %v1312 = vpack.c.b16 %v1200, %v1196
        %v1313 = vpack.c.b16 %v1201, %v1197
        %v1314 = vpack.c.b16 %v1202, %v1198
        %v1315 = vpack.c.b16 %v1203, %v1199
        %v1316 = vpack.c.b16 %v1208, %v1204
        %v1317 = vpack.c.b16 %v1209, %v1205
        %v1318 = vpack.c.b16 %v1210, %v1206
        %v1319 = vpack.c.b16 %v1211, %v1207
        %v1320 = vpack.c.b16 %v1216, %v1212
        %v1321 = vpack.c.b16 %v1217, %v1213
        %v1322 = vpack.c.b16 %v1218, %v1214
        %v1323 = vpack.c.b16 %v1219, %v1215
        %v1324 = vpack.c.b16 %v1224, %v1220
        %v1325 = vpack.c.b16 %v1225, %v1221
        %v1326 = vpack.c.b16 %v1226, %v1222
        %v1327 = vpack.c.b16 %v1227, %v1223
        %v1328 = vpack.c.b16 %v1232, %v1228
        %v1329 = vpack.c.b16 %v1233, %v1229
        %v1330 = vpack.c.b16 %v1234, %v1230
        %v1331 = vpack.c.b16 %v1235, %v1231
        %v1332 = vpack.c.b16 %v1240, %v1236
        %v1333 = vpack.c.b16 %v1241, %v1237
        %v1334 = vpack.c.b16 %v1242, %v1238
        %v1335 = vpack.c.b16 %v1243, %v1239
        %v1336 = vpack.c.b16 %v1248, %v1244
        %v1337 = vpack.c.b16 %v1249, %v1245
        %v1338 = vpack.c.b16 %v1250, %v1246
        %v1339 = vpack.c.b16 %v1251, %v1247
        %v1340 = vpack.c.b16 %v1256, %v1252
        %v1341 = vpack.c.b16 %v1257, %v1253
        %v1342 = vpack.c.b16 %v1258, %v1254
        %v1343 = vpack.c.b16 %v1259, %v1255
        %v1344 = vpack.c.b16 %v1264, %v1260
        %v1345 = vpack.c.b16 %v1265, %v1261
        %v1346 = vpack.c.b16 %v1266, %v1262
        %v1347 = vpack.c.b16 %v1267, %v1263
        %v1348 = vpack.c.b16 %v1272, %v1268
        %v1349 = vpack.c.b16 %v1273, %v1269
        %v1350 = vpack.c.b16 %v1274, %v1270
        %v1351 = vpack.c.b16 %v1275, %v1271
        %v1352 = vpack.c.b16 %v1280, %v1276
        %v1353 = vpack.c.b16 %v1281, %v1277
        %v1354 = vpack.c.b16 %v1282, %v1278
        %v1355 = vpack.c.b16 %v1283, %v1279
        %v1356 = vpack.c.b16 %v1288, %v1284
        %v1357 = vpack.c.b16 %v1289, %v1285
        %v1358 = vpack.c.b16 %v1290, %v1286
        %v1359 = vpack.c.b16 %v1291, %v1287
        %v1360 = vpack.c.b16 %v1296, %v1292
        %v1361 = vpack.c.b16 %v1297, %v1293
        %v1362 = vpack.c.b16 %v1298, %v1294
        %v1363 = vpack.c.b16 %v1299, %v1295
        %1428 = vmatprep.subr.bf16.mxu0 0
        %1429 = vmatpush1.bf16.msra.mxu0 %v980
        %1430 = vmatprep.subr.bf16.mxu0 0
        %1431 = vmatpush1.bf16.msra.mxu0 %v981
        %1432 = vmatprep.subr.bf16.mxu0 0
        %1433 = vmatpush1.bf16.msra.mxu0 %v982
        %1434 = vmatprep.subr.bf16.mxu0 0
        %1435 = vmatpush1.bf16.msra.mxu0 %v983
        %1436 = vmatprep.subr.bf16.mxu0 0
        %1437 = vmatpush1.bf16.msra.mxu0 %v984
        %1438 = vmatprep.subr.bf16.mxu0 0
        %1439 = vmatpush1.bf16.msra.mxu0 %v985
        %1440 = vmatprep.subr.bf16.mxu0 0
        %1441 = vmatpush1.bf16.msra.mxu0 %v986
        %1442 = vmatprep.subr.bf16.mxu0 0
        %1443 = vmatpush1.bf16.msra.mxu0 %v987
        %1444 = vmatprep.subr.bf16.mxu0 0
        %1445 = vmatpush1.bf16.msra.mxu0 %v988
        %1446 = vmatprep.subr.bf16.mxu0 0
        %1447 = vmatpush1.bf16.msra.mxu0 %v989
        %1448 = vmatprep.subr.bf16.mxu0 0
        %1449 = vmatpush1.bf16.msra.mxu0 %v990
        %1450 = vmatprep.subr.bf16.mxu0 0
        %1451 = vmatpush1.bf16.msra.mxu0 %v991
        %1452 = vmatprep.subr.bf16.mxu0 0
        %1453 = vmatpush1.bf16.msra.mxu0 %v992
        %1454 = vmatprep.subr.bf16.mxu0 0
        %1455 = vmatpush1.bf16.msra.mxu0 %v993
        %1456 = vmatprep.subr.bf16.mxu0 0
        %1457 = vmatpush1.bf16.msra.mxu0 %v994
        %1458 = vmatprep.subr.bf16.mxu0 0
        %1459 = vmatpush1.bf16.msra.mxu0 %v995
        %1460 = vmatprep.mubr.bf16.mxu0 %v1301
        %1461 = vmatmul.mubr.bf16.gmra.mrb[0].mxu0 %v1300
        %v1462 = vpop.f32.mrb[0].mxu0
        %v1463 = vadd.f32 0.0, %v1462
        %v1464 = vpop.f32.mrb[0].mxu0
        %v1465 = vpop.f32.mrb[0].mxu0
        %v1466 = vadd.f32 0.0, %v1465
        %v1467 = vpop.f32.mrb[0].mxu0
        %1468 = vmatprep.mubr.bf16.mxu0 %v1305
        %1469 = vmatmul.mubr.bf16.gmra.mrb[0].mxu0 %v1304
        %v1470 = vpop.f32.mrb[0].mxu0
        %v1471 = vadd.f32 0.0, %v1470
        %v1472 = vpop.f32.mrb[0].mxu0
        %v1473 = vpop.f32.mrb[0].mxu0
        %v1474 = vadd.f32 0.0, %v1473
        %v1475 = vpop.f32.mrb[0].mxu0
        %1476 = vmatprep.mubr.bf16.mxu0 %v1309
        %1477 = vmatmul.mubr.bf16.gmra.mrb[0].mxu0 %v1308
        %v1478 = vpop.f32.mrb[0].mxu0
        %v1479 = vadd.f32 0.0, %v1478
        %v1480 = vpop.f32.mrb[0].mxu0
        %v1481 = vpop.f32.mrb[0].mxu0
        %v1482 = vadd.f32 0.0, %v1481
        %v1483 = vpop.f32.mrb[0].mxu0
        %1484 = vmatprep.mubr.bf16.mxu0 %v1313
        %1485 = vmatmul.mubr.bf16.gmra.mrb[0].mxu0 %v1312
        %v1486 = vpop.f32.mrb[0].mxu0
        %v1487 = vadd.f32 0.0, %v1486
        %v1488 = vpop.f32.mrb[0].mxu0
        %v1489 = vpop.f32.mrb[0].mxu0
        %v1490 = vadd.f32 0.0, %v1489
        %v1491 = vpop.f32.mrb[0].mxu0
        %1492 = vmatprep.mubr.bf16.mxu0 %v1317
        %1493 = vmatmul.mubr.bf16.gmra.mrb[0].mxu0 %v1316
        %v1494 = vpop.f32.mrb[0].mxu0
        %v1495 = vadd.f32 0.0, %v1494
        %v1496 = vpop.f32.mrb[0].mxu0
        %v1497 = vpop.f32.mrb[0].mxu0
        %v1498 = vadd.f32 0.0, %v1497
        %v1499 = vpop.f32.mrb[0].mxu0
        %1500 = vmatprep.mubr.bf16.mxu0 %v1321
        %1501 = vmatmul.mubr.bf16.gmra.mrb[0].mxu0 %v1320
        %v1502 = vpop.f32.mrb[0].mxu0
        %v1503 = vadd.f32 0.0, %v1502
        %v1504 = vpop.f32.mrb[0].mxu0
        %v1505 = vpop.f32.mrb[0].mxu0
        %v1506 = vadd.f32 0.0, %v1505
        %v1507 = vpop.f32.mrb[0].mxu0
        %1508 = vmatprep.mubr.bf16.mxu0 %v1325
        %1509 = vmatmul.mubr.bf16.gmra.mrb[0].mxu0 %v1324
        %v1510 = vpop.f32.mrb[0].mxu0
        %v1511 = vadd.f32 0.0, %v1510
        %v1512 = vpop.f32.mrb[0].mxu0
        %v1513 = vpop.f32.mrb[0].mxu0
        %v1514 = vadd.f32 0.0, %v1513
        %v1515 = vpop.f32.mrb[0].mxu0
        %1516 = vmatprep.mubr.bf16.mxu0 %v1329
        %1517 = vmatmul.mubr.bf16.gmra.mrb[0].mxu0 %v1328
        %v1518 = vpop.f32.mrb[0].mxu0
        %v1519 = vadd.f32 0.0, %v1518
        %v1520 = vpop.f32.mrb[0].mxu0
        %v1521 = vpop.f32.mrb[0].mxu0
        %v1522 = vadd.f32 0.0, %v1521
        %v1523 = vpop.f32.mrb[0].mxu0
        %1524 = vmatprep.mubr.bf16.mxu0 %v1333
        %1525 = vmatmul.mubr.bf16.gmra.mrb[0].mxu0 %v1332
        %v1526 = vpop.f32.mrb[0].mxu0
        %v1527 = vadd.f32 0.0, %v1526
        %v1528 = vpop.f32.mrb[0].mxu0
        %v1529 = vpop.f32.mrb[0].mxu0
        %v1530 = vadd.f32 0.0, %v1529
        %v1531 = vpop.f32.mrb[0].mxu0
        %1532 = vmatprep.mubr.bf16.mxu0 %v1337
        %1533 = vmatmul.mubr.bf16.gmra.mrb[0].mxu0 %v1336
        %v1534 = vpop.f32.mrb[0].mxu0
        %v1535 = vadd.f32 0.0, %v1534
        %v1536 = vpop.f32.mrb[0].mxu0
        %v1537 = vpop.f32.mrb[0].mxu0
        %v1538 = vadd.f32 0.0, %v1537
        %v1539 = vpop.f32.mrb[0].mxu0
        %1540 = vmatprep.mubr.bf16.mxu0 %v1341
        %1541 = vmatmul.mubr.bf16.gmra.mrb[0].mxu0 %v1340
        %v1542 = vpop.f32.mrb[0].mxu0
        %v1543 = vadd.f32 0.0, %v1542
        %v1544 = vpop.f32.mrb[0].mxu0
        %v1545 = vpop.f32.mrb[0].mxu0
        %v1546 = vadd.f32 0.0, %v1545
        %v1547 = vpop.f32.mrb[0].mxu0
        %1548 = vmatprep.mubr.bf16.mxu0 %v1345
        %1549 = vmatmul.mubr.bf16.gmra.mrb[0].mxu0 %v1344
        %v1550 = vpop.f32.mrb[0].mxu0
        %v1551 = vadd.f32 0.0, %v1550
        %v1552 = vpop.f32.mrb[0].mxu0
        %v1553 = vpop.f32.mrb[0].mxu0
        %v1554 = vadd.f32 0.0, %v1553
        %v1555 = vpop.f32.mrb[0].mxu0
        %1556 = vmatprep.mubr.bf16.mxu0 %v1349
        %1557 = vmatmul.mubr.bf16.gmra.mrb[0].mxu0 %v1348
        %v1558 = vpop.f32.mrb[0].mxu0
        %v1559 = vadd.f32 0.0, %v1558
        %v1560 = vpop.f32.mrb[0].mxu0
        %v1561 = vpop.f32.mrb[0].mxu0
        %v1562 = vadd.f32 0.0, %v1561
        %v1563 = vpop.f32.mrb[0].mxu0
        %1564 = vmatprep.mubr.bf16.mxu0 %v1353
        %1565 = vmatmul.mubr.bf16.gmra.mrb[0].mxu0 %v1352
        %v1566 = vpop.f32.mrb[0].mxu0
        %v1567 = vadd.f32 0.0, %v1566
        %v1568 = vpop.f32.mrb[0].mxu0
        %v1569 = vpop.f32.mrb[0].mxu0
        %v1570 = vadd.f32 0.0, %v1569
        %v1571 = vpop.f32.mrb[0].mxu0
        %1572 = vmatprep.mubr.bf16.mxu0 %v1357
        %1573 = vmatmul.mubr.bf16.gmra.mrb[0].mxu0 %v1356
        %v1574 = vpop.f32.mrb[0].mxu0
        %v1575 = vadd.f32 0.0, %v1574
        %v1576 = vpop.f32.mrb[0].mxu0
        %v1577 = vpop.f32.mrb[0].mxu0
        %v1578 = vadd.f32 0.0, %v1577
        %v1579 = vpop.f32.mrb[0].mxu0
        %1580 = vmatprep.mubr.bf16.mxu0 %v1361
        %1581 = vmatmul.mubr.bf16.gmra.mrb[0].mxu0 %v1360
        %v1582 = vpop.f32.mrb[0].mxu0
        %v1583 = vadd.f32 0.0, %v1582
        %v1584 = vpop.f32.mrb[0].mxu0
        %v1585 = vpop.f32.mrb[0].mxu0
        %v1586 = vadd.f32 0.0, %v1585
        %v1587 = vpop.f32.mrb[0].mxu0
        %1588 = vdwg.mxu0
        %1589 = vmatprep.subr.bf16.mxu0 0
        %1590 = vmatpush1.bf16.msra.mxu0 %v996
        %1591 = vmatprep.subr.bf16.mxu0 0
        %1592 = vmatpush1.bf16.msra.mxu0 %v997
        %1593 = vmatprep.subr.bf16.mxu0 0
        %1594 = vmatpush1.bf16.msra.mxu0 %v998
        %1595 = vmatprep.subr.bf16.mxu0 0
        %1596 = vmatpush1.bf16.msra.mxu0 %v999
        %1597 = vmatprep.subr.bf16.mxu0 0
        %1598 = vmatpush1.bf16.msra.mxu0 %v1000
        %1599 = vmatprep.subr.bf16.mxu0 0
        %1600 = vmatpush1.bf16.msra.mxu0 %v1001
        %1601 = vmatprep.subr.bf16.mxu0 0
        %1602 = vmatpush1.bf16.msra.mxu0 %v1002
        %1603 = vmatprep.subr.bf16.mxu0 0
        %1604 = vmatpush1.bf16.msra.mxu0 %v1003
        %1605 = vmatprep.subr.bf16.mxu0 0
        %1606 = vmatpush1.bf16.msra.mxu0 %v1004
        %1607 = vmatprep.subr.bf16.mxu0 0
        %1608 = vmatpush1.bf16.msra.mxu0 %v1005
        %1609 = vmatprep.subr.bf16.mxu0 0
        %1610 = vmatpush1.bf16.msra.mxu0 %v1006
        %1611 = vmatprep.subr.bf16.mxu0 0
        %1612 = vmatpush1.bf16.msra.mxu0 %v1007
        %1613 = vmatprep.subr.bf16.mxu0 0
        %1614 = vmatpush1.bf16.msra.mxu0 %v1008
        %1615 = vmatprep.subr.bf16.mxu0 0
        %1616 = vmatpush1.bf16.msra.mxu0 %v1009
        %1617 = vmatprep.subr.bf16.mxu0 0
        %1618 = vmatpush1.bf16.msra.mxu0 %v1010
        %1619 = vmatprep.subr.bf16.mxu0 0
        %1620 = vmatpush1.bf16.msra.mxu0 %v1011
        %1621 = vmatprep.mubr.bf16.mxu0 %v1303
        %1622 = vmatmul.mubr.bf16.gmra.mrb[0].mxu0 %v1302
        %v1623 = vpop.f32.mrb[0].mxu0
        %v1624 = vadd.f32 %v1463, %v1623
        %v1625 = vpop.f32.mrb[0].mxu0
        %v1626 = vpop.f32.mrb[0].mxu0
        %v1627 = vadd.f32 %v1466, %v1626
        %v1628 = vpop.f32.mrb[0].mxu0
        %1629 = vmatprep.mubr.bf16.mxu0 %v1307
        %1630 = vmatmul.mubr.bf16.gmra.mrb[0].mxu0 %v1306
        %v1631 = vpop.f32.mrb[0].mxu0
        %v1632 = vadd.f32 %v1471, %v1631
        %v1633 = vpop.f32.mrb[0].mxu0
        %v1634 = vpop.f32.mrb[0].mxu0
        %v1635 = vadd.f32 %v1474, %v1634
        %v1636 = vpop.f32.mrb[0].mxu0
        %1637 = vmatprep.mubr.bf16.mxu0 %v1311
        %1638 = vmatmul.mubr.bf16.gmra.mrb[0].mxu0 %v1310
        %v1639 = vpop.f32.mrb[0].mxu0
        %v1640 = vadd.f32 %v1479, %v1639
        %v1641 = vpop.f32.mrb[0].mxu0
        %v1642 = vpop.f32.mrb[0].mxu0
        %v1643 = vadd.f32 %v1482, %v1642
        %v1644 = vpop.f32.mrb[0].mxu0
        %1645 = vmatprep.mubr.bf16.mxu0 %v1315
        %1646 = vmatmul.mubr.bf16.gmra.mrb[0].mxu0 %v1314
        %v1647 = vpop.f32.mrb[0].mxu0
        %v1648 = vadd.f32 %v1487, %v1647
        %v1649 = vpop.f32.mrb[0].mxu0
        %v1650 = vpop.f32.mrb[0].mxu0
        %v1651 = vadd.f32 %v1490, %v1650
        %v1652 = vpop.f32.mrb[0].mxu0
        %1653 = vmatprep.mubr.bf16.mxu0 %v1319
        %1654 = vmatmul.mubr.bf16.gmra.mrb[0].mxu0 %v1318
        %v1655 = vpop.f32.mrb[0].mxu0
        %v1656 = vadd.f32 %v1495, %v1655
        %v1657 = vpop.f32.mrb[0].mxu0
        %v1658 = vpop.f32.mrb[0].mxu0
        %v1659 = vadd.f32 %v1498, %v1658
        %v1660 = vpop.f32.mrb[0].mxu0
        %1661 = vmatprep.mubr.bf16.mxu0 %v1323
        %1662 = vmatmul.mubr.bf16.gmra.mrb[0].mxu0 %v1322
        %v1663 = vpop.f32.mrb[0].mxu0
        %v1664 = vadd.f32 %v1503, %v1663
        %v1665 = vpop.f32.mrb[0].mxu0
        %v1666 = vpop.f32.mrb[0].mxu0
        %v1667 = vadd.f32 %v1506, %v1666
        %v1668 = vpop.f32.mrb[0].mxu0
        %1669 = vmatprep.mubr.bf16.mxu0 %v1327
        %1670 = vmatmul.mubr.bf16.gmra.mrb[0].mxu0 %v1326
        %v1671 = vpop.f32.mrb[0].mxu0
        %v1672 = vadd.f32 %v1511, %v1671
        %v1673 = vpop.f32.mrb[0].mxu0
        %v1674 = vpop.f32.mrb[0].mxu0
        %v1675 = vadd.f32 %v1514, %v1674
        %v1676 = vpop.f32.mrb[0].mxu0
        %1677 = vmatprep.mubr.bf16.mxu0 %v1331
        %1678 = vmatmul.mubr.bf16.gmra.mrb[0].mxu0 %v1330
        %v1679 = vpop.f32.mrb[0].mxu0
        %v1680 = vadd.f32 %v1519, %v1679
        %v1681 = vpop.f32.mrb[0].mxu0
        %v1682 = vpop.f32.mrb[0].mxu0
        %v1683 = vadd.f32 %v1522, %v1682
        %v1684 = vpop.f32.mrb[0].mxu0
        %1685 = vmatprep.mubr.bf16.mxu0 %v1335
        %1686 = vmatmul.mubr.bf16.gmra.mrb[0].mxu0 %v1334
        %v1687 = vpop.f32.mrb[0].mxu0
        %v1688 = vadd.f32 %v1527, %v1687
        %v1689 = vpop.f32.mrb[0].mxu0
        %v1690 = vpop.f32.mrb[0].mxu0
        %v1691 = vadd.f32 %v1530, %v1690
        %v1692 = vpop.f32.mrb[0].mxu0
        %1693 = vmatprep.mubr.bf16.mxu0 %v1339
        %1694 = vmatmul.mubr.bf16.gmra.mrb[0].mxu0 %v1338
        %v1695 = vpop.f32.mrb[0].mxu0
        %v1696 = vadd.f32 %v1535, %v1695
        %v1697 = vpop.f32.mrb[0].mxu0
        %v1698 = vpop.f32.mrb[0].mxu0
        %v1699 = vadd.f32 %v1538, %v1698
        %v1700 = vpop.f32.mrb[0].mxu0
        %1701 = vmatprep.mubr.bf16.mxu0 %v1343
        %1702 = vmatmul.mubr.bf16.gmra.mrb[0].mxu0 %v1342
        %v1703 = vpop.f32.mrb[0].mxu0
        %v1704 = vadd.f32 %v1543, %v1703
        %v1705 = vpop.f32.mrb[0].mxu0
        %v1706 = vpop.f32.mrb[0].mxu0
        %v1707 = vadd.f32 %v1546, %v1706
        %v1708 = vpop.f32.mrb[0].mxu0
        %1709 = vmatprep.mubr.bf16.mxu0 %v1347
        %1710 = vmatmul.mubr.bf16.gmra.mrb[0].mxu0 %v1346
        %v1711 = vpop.f32.mrb[0].mxu0
        %v1712 = vadd.f32 %v1551, %v1711
        %v1713 = vpop.f32.mrb[0].mxu0
        %v1714 = vpop.f32.mrb[0].mxu0
        %v1715 = vadd.f32 %v1554, %v1714
        %v1716 = vpop.f32.mrb[0].mxu0
        %1717 = vmatprep.mubr.bf16.mxu0 %v1351
        %1718 = vmatmul.mubr.bf16.gmra.mrb[0].mxu0 %v1350
        %v1719 = vpop.f32.mrb[0].mxu0
        %v1720 = vadd.f32 %v1559, %v1719
        %v1721 = vpop.f32.mrb[0].mxu0
        %v1722 = vpop.f32.mrb[0].mxu0
        %v1723 = vadd.f32 %v1562, %v1722
        %v1724 = vpop.f32.mrb[0].mxu0
        %1725 = vmatprep.mubr.bf16.mxu0 %v1355
        %1726 = vmatmul.mubr.bf16.gmra.mrb[0].mxu0 %v1354
        %v1727 = vpop.f32.mrb[0].mxu0
        %v1728 = vadd.f32 %v1567, %v1727
        %v1729 = vpop.f32.mrb[0].mxu0
        %v1730 = vpop.f32.mrb[0].mxu0
        %v1731 = vadd.f32 %v1570, %v1730
        %v1732 = vpop.f32.mrb[0].mxu0
        %1733 = vmatprep.mubr.bf16.mxu0 %v1359
        %1734 = vmatmul.mubr.bf16.gmra.mrb[0].mxu0 %v1358
        %v1735 = vpop.f32.mrb[0].mxu0
        %v1736 = vadd.f32 %v1575, %v1735
        %v1737 = vpop.f32.mrb[0].mxu0
        %v1738 = vpop.f32.mrb[0].mxu0
        %v1739 = vadd.f32 %v1578, %v1738
        %v1740 = vpop.f32.mrb[0].mxu0
        %1741 = vmatprep.mubr.bf16.mxu0 %v1363
        %1742 = vmatmul.mubr.bf16.gmra.mrb[0].mxu0 %v1362
        %v1743 = vpop.f32.mrb[0].mxu0
        %v1744 = vadd.f32 %v1583, %v1743
        %v1745 = vpop.f32.mrb[0].mxu0
        %v1746 = vpop.f32.mrb[0].mxu0
        %v1747 = vadd.f32 %v1586, %v1746
        %v1748 = vpop.f32.mrb[0].mxu0
        %1749 = vdwg.mxu0
        %v1750 = vadd.f32 %v1012, %v1624
        %v1751 = vadd.f32 %v1013, %v1627
        %v1752 = vadd.f32 %v1014, %v1632
        %v1753 = vadd.f32 %v1015, %v1635
        %v1754 = vadd.f32 %v1016, %v1640
        %v1755 = vadd.f32 %v1017, %v1643
        %v1756 = vadd.f32 %v1018, %v1648
        %v1757 = vadd.f32 %v1019, %v1651
        %v1758 = vadd.f32 %v1020, %v1656
        %v1759 = vadd.f32 %v1021, %v1659
        %v1760 = vadd.f32 %v1022, %v1664
        %v1761 = vadd.f32 %v1023, %v1667
        %v1762 = vadd.f32 %v1024, %v1672
        %v1763 = vadd.f32 %v1025, %v1675
        %v1764 = vadd.f32 %v1026, %v1680
        %v1765 = vadd.f32 %v1027, %v1683
        %v1766 = vadd.f32 %v1028, %v1688
        %v1767 = vadd.f32 %v1029, %v1691
        %v1768 = vadd.f32 %v1030, %v1696
        %v1769 = vadd.f32 %v1031, %v1699
        %v1770 = vadd.f32 %v1032, %v1704
        %v1771 = vadd.f32 %v1033, %v1707
        %v1772 = vadd.f32 %v1034, %v1712
        %v1773 = vadd.f32 %v1035, %v1715
        %v1774 = vadd.f32 %v1036, %v1720
        %v1775 = vadd.f32 %v1037, %v1723
        %v1776 = vadd.f32 %v1038, %v1728
        %v1777 = vadd.f32 %v1039, %v1731
        %v1778 = vadd.f32 %v1040, %v1736
        %v1779 = vadd.f32 %v1041, %v1739
        %v1780 = vadd.f32 %v1042, %v1744
        %v1781 = vadd.f32 %v1043, %v1747
        %1782 = vst [vmem:[#allocation2] sm:$0xff] %v1750
        %1783 = vst [vmem:[#allocation2 + $0x8] sm:$0xff] %v1751
        %1784 = vst [vmem:[#allocation2 + $0x10] sm:$0xff] %v1752
        %1785 = vst [vmem:[#allocation2 + $0x18] sm:$0xff] %v1753
        %1786 = vst [vmem:[#allocation2 + $0x20] sm:$0xff] %v1754
        %1787 = vst [vmem:[#allocation2 + $0x28] sm:$0xff] %v1755
        %1788 = vst [vmem:[#allocation2 + $0x30] sm:$0xff] %v1756
        %1789 = vst [vmem:[#allocation2 + $0x38] sm:$0xff] %v1757
        %1790 = vst [vmem:[#allocation2 + $0x40] sm:$0xff] %v1758
        %1791 = vst [vmem:[#allocation2 + $0x48] sm:$0xff] %v1759
        %1792 = vst [vmem:[#allocation2 + $0x50] sm:$0xff] %v1760
        %1793 = vst [vmem:[#allocation2 + $0x58] sm:$0xff] %v1761
        %1794 = vst [vmem:[#allocation2 + $0x60] sm:$0xff] %v1762
        %1795 = vst [vmem:[#allocation2 + $0x68] sm:$0xff] %v1763
        %1796 = vst [vmem:[#allocation2 + $0x70] sm:$0xff] %v1764
        %1797 = vst [vmem:[#allocation2 + $0x78] sm:$0xff] %v1765
        %1798 = vst [vmem:[#allocation2 + $0x80] sm:$0xff] %v1766
        %1799 = vst [vmem:[#allocation2 + $0x88] sm:$0xff] %v1767
        %1800 = vst [vmem:[#allocation2 + $0x90] sm:$0xff] %v1768
        %1801 = vst [vmem:[#allocation2 + $0x98] sm:$0xff] %v1769
        %1802 = vst [vmem:[#allocation2 + $0xa0] sm:$0xff] %v1770
        %1803 = vst [vmem:[#allocation2 + $0xa8] sm:$0xff] %v1771
        %1804 = vst [vmem:[#allocation2 + $0xb0] sm:$0xff] %v1772
        %1805 = vst [vmem:[#allocation2 + $0xb8] sm:$0xff] %v1773
        %1806 = vst [vmem:[#allocation2 + $0xc0] sm:$0xff] %v1774
        %1807 = vst [vmem:[#allocation2 + $0xc8] sm:$0xff] %v1775
        %1808 = vst [vmem:[#allocation2 + $0xd0] sm:$0xff] %v1776
        %1809 = vst [vmem:[#allocation2 + $0xd8] sm:$0xff] %v1777
        %1810 = vst [vmem:[#allocation2 + $0xe0] sm:$0xff] %v1778
        %1811 = vst [vmem:[#allocation2 + $0xe8] sm:$0xff] %v1779
        %1812 = vst [vmem:[#allocation2 + $0xf0] sm:$0xff] %v1780
        %1813 = vst [vmem:[#allocation2 + $0xf8] sm:$0xff] %v1781
        // Predicated region
        $region57: #{tpu_custom_call.1} parent=43 // pred_check
          %p1814 = pneg %p368
        $region58: #{tpu_custom_call.1} parent=43 // pred_check_branch
          %1816 = sbr.rel (%p1814) target = $region60
        $region59: #{tpu_custom_call.1} parent=43 // pred_region
          %v1817 = vld [vmem:[#allocation2] sm:$0xff]
          %v1818 = vld [vmem:[#allocation2 + $0x8] sm:$0xff]
          %v1819 = vld [vmem:[#allocation2 + $0x10] sm:$0xff]
          %v1820 = vld [vmem:[#allocation2 + $0x18] sm:$0xff]
          %v1821 = vld [vmem:[#allocation2 + $0x20] sm:$0xff]
          %v1822 = vld [vmem:[#allocation2 + $0x28] sm:$0xff]
          %v1823 = vld [vmem:[#allocation2 + $0x30] sm:$0xff]
          %v1824 = vld [vmem:[#allocation2 + $0x38] sm:$0xff]
          %v1825 = vld [vmem:[#allocation2 + $0x40] sm:$0xff]
          %v1826 = vld [vmem:[#allocation2 + $0x48] sm:$0xff]
          %v1827 = vld [vmem:[#allocation2 + $0x50] sm:$0xff]
          %v1828 = vld [vmem:[#allocation2 + $0x58] sm:$0xff]
          %v1829 = vld [vmem:[#allocation2 + $0x60] sm:$0xff]
          %v1830 = vld [vmem:[#allocation2 + $0x68] sm:$0xff]
          %v1831 = vld [vmem:[#allocation2 + $0x70] sm:$0xff]
          %v1832 = vld [vmem:[#allocation2 + $0x78] sm:$0xff]
          %v1833 = vld [vmem:[#allocation2 + $0x80] sm:$0xff]
          %v1834 = vld [vmem:[#allocation2 + $0x88] sm:$0xff]
          %v1835 = vld [vmem:[#allocation2 + $0x90] sm:$0xff]
          %v1836 = vld [vmem:[#allocation2 + $0x98] sm:$0xff]
          %v1837 = vld [vmem:[#allocation2 + $0xa0] sm:$0xff]
          %v1838 = vld [vmem:[#allocation2 + $0xa8] sm:$0xff]
          %v1839 = vld [vmem:[#allocation2 + $0xb0] sm:$0xff]
          %v1840 = vld [vmem:[#allocation2 + $0xb8] sm:$0xff]
          %v1841 = vld [vmem:[#allocation2 + $0xc0] sm:$0xff]
          %v1842 = vld [vmem:[#allocation2 + $0xc8] sm:$0xff]
          %v1843 = vld [vmem:[#allocation2 + $0xd0] sm:$0xff]
          %v1844 = vld [vmem:[#allocation2 + $0xd8] sm:$0xff]
          %v1845 = vld [vmem:[#allocation2 + $0xe0] sm:$0xff]
          %v1846 = vld [vmem:[#allocation2 + $0xe8] sm:$0xff]
          %v1847 = vld [vmem:[#allocation2 + $0xf0] sm:$0xff]
          %v1848 = vld [vmem:[#allocation2 + $0xf8] sm:$0xff]
          %v1849 = vld [vmem:[%s364] sm:$0xff]
          %v1850 = vld [vmem:[%s364 + $0x8] sm:$0xff]
          %v1851 = vld [vmem:[%s364 + $0x10] sm:$0xff]
          %v1852 = vld [vmem:[%s364 + $0x18] sm:$0xff]
          %v1853 = vld [vmem:[%s364 + $0x20] sm:$0xff]
          %v1854 = vld [vmem:[%s364 + $0x28] sm:$0xff]
          %v1855 = vld [vmem:[%s364 + $0x30] sm:$0xff]
          %v1856 = vld [vmem:[%s364 + $0x38] sm:$0xff]
          %v1857 = vld [vmem:[%s364 + $0x40] sm:$0xff]
          %v1858 = vld [vmem:[%s364 + $0x48] sm:$0xff]
          %v1859 = vld [vmem:[%s364 + $0x50] sm:$0xff]
          %v1860 = vld [vmem:[%s364 + $0x58] sm:$0xff]
          %v1861 = vld [vmem:[%s364 + $0x60] sm:$0xff]
          %v1862 = vld [vmem:[%s364 + $0x68] sm:$0xff]
          %v1863 = vld [vmem:[%s364 + $0x70] sm:$0xff]
          %v1864 = vld [vmem:[%s364 + $0x78] sm:$0xff]
          %v1865 = vld [vmem:[%s364 + $0x80] sm:$0xff]
          %v1866 = vld [vmem:[%s364 + $0x88] sm:$0xff]
          %v1867 = vld [vmem:[%s364 + $0x90] sm:$0xff]
          %v1868 = vld [vmem:[%s364 + $0x98] sm:$0xff]
          %v1869 = vld [vmem:[%s364 + $0xa0] sm:$0xff]
          %v1870 = vld [vmem:[%s364 + $0xa8] sm:$0xff]
          %v1871 = vld [vmem:[%s364 + $0xb0] sm:$0xff]
          %v1872 = vld [vmem:[%s364 + $0xb8] sm:$0xff]
          %v1873 = vld [vmem:[%s364 + $0xc0] sm:$0xff]
          %v1874 = vld [vmem:[%s364 + $0xc8] sm:$0xff]
          %v1875 = vld [vmem:[%s364 + $0xd0] sm:$0xff]
          %v1876 = vld [vmem:[%s364 + $0xd8] sm:$0xff]
          %v1877 = vld [vmem:[%s364 + $0xe0] sm:$0xff]
          %v1878 = vld [vmem:[%s364 + $0xe8] sm:$0xff]
          %v1879 = vld [vmem:[%s364 + $0xf0] sm:$0xff]
          %v1880 = vld [vmem:[%s364 + $0xf8] sm:$0xff]
          %1882 = vset.pattern.permute.xlu0 0
          %1883 = vperm.xlu0 %1882, %v1849
          %v1884 = vpop.permute.xlu0 %1883
          %1887 = vset.pattern.permute.xlu0 0
          %1888 = vperm.xlu0 %1887, %v1850
          %v1889 = vpop.permute.xlu0 %1888
          %1892 = vset.pattern.permute.xlu0 0
          %1893 = vperm.xlu0 %1892, %v1851
          %v1894 = vpop.permute.xlu0 %1893
          %1897 = vset.pattern.permute.xlu0 0
          %1898 = vperm.xlu0 %1897, %v1852
          %v1899 = vpop.permute.xlu0 %1898
          %1902 = vset.pattern.permute.xlu0 0
          %1903 = vperm.xlu0 %1902, %v1853
          %v1904 = vpop.permute.xlu0 %1903
          %1907 = vset.pattern.permute.xlu0 0
          %1908 = vperm.xlu0 %1907, %v1854
          %v1909 = vpop.permute.xlu0 %1908
          %1912 = vset.pattern.permute.xlu0 0
          %1913 = vperm.xlu0 %1912, %v1855
          %v1914 = vpop.permute.xlu0 %1913
          %1917 = vset.pattern.permute.xlu0 0
          %1918 = vperm.xlu0 %1917, %v1856
          %v1919 = vpop.permute.xlu0 %1918
          %1922 = vset.pattern.permute.xlu0 0
          %1923 = vperm.xlu0 %1922, %v1857
          %v1924 = vpop.permute.xlu0 %1923
          %1927 = vset.pattern.permute.xlu0 0
          %1928 = vperm.xlu0 %1927, %v1858
          %v1929 = vpop.permute.xlu0 %1928
          %1932 = vset.pattern.permute.xlu0 0
          %1933 = vperm.xlu0 %1932, %v1859
          %v1934 = vpop.permute.xlu0 %1933
          %1937 = vset.pattern.permute.xlu0 0
          %1938 = vperm.xlu0 %1937, %v1860
          %v1939 = vpop.permute.xlu0 %1938
          %1942 = vset.pattern.permute.xlu0 0
          %1943 = vperm.xlu0 %1942, %v1861
          %v1944 = vpop.permute.xlu0 %1943
          %1947 = vset.pattern.permute.xlu0 0
          %1948 = vperm.xlu0 %1947, %v1862
          %v1949 = vpop.permute.xlu0 %1948
          %1952 = vset.pattern.permute.xlu0 0
          %1953 = vperm.xlu0 %1952, %v1863
          %v1954 = vpop.permute.xlu0 %1953
          %1957 = vset.pattern.permute.xlu0 0
          %1958 = vperm.xlu0 %1957, %v1864
          %v1959 = vpop.permute.xlu0 %1958
          %1962 = vset.pattern.permute.xlu0 0
          %1963 = vperm.xlu0 %1962, %v1865
          %v1964 = vpop.permute.xlu0 %1963
          %1967 = vset.pattern.permute.xlu0 0
          %1968 = vperm.xlu0 %1967, %v1866
          %v1969 = vpop.permute.xlu0 %1968
          %1972 = vset.pattern.permute.xlu0 0
          %1973 = vperm.xlu0 %1972, %v1867
          %v1974 = vpop.permute.xlu0 %1973
          %1977 = vset.pattern.permute.xlu0 0
          %1978 = vperm.xlu0 %1977, %v1868
          %v1979 = vpop.permute.xlu0 %1978
          %1982 = vset.pattern.permute.xlu0 0
          %1983 = vperm.xlu0 %1982, %v1869
          %v1984 = vpop.permute.xlu0 %1983
          %1987 = vset.pattern.permute.xlu0 0
          %1988 = vperm.xlu0 %1987, %v1870
          %v1989 = vpop.permute.xlu0 %1988
          %1992 = vset.pattern.permute.xlu0 0
          %1993 = vperm.xlu0 %1992, %v1871
          %v1994 = vpop.permute.xlu0 %1993
          %1997 = vset.pattern.permute.xlu0 0
          %1998 = vperm.xlu0 %1997, %v1872
          %v1999 = vpop.permute.xlu0 %1998
          %2002 = vset.pattern.permute.xlu0 0
          %2003 = vperm.xlu0 %2002, %v1873
          %v2004 = vpop.permute.xlu0 %2003
          %2007 = vset.pattern.permute.xlu0 0
          %2008 = vperm.xlu0 %2007, %v1874
          %v2009 = vpop.permute.xlu0 %2008
          %2012 = vset.pattern.permute.xlu0 0
          %2013 = vperm.xlu0 %2012, %v1875
          %v2014 = vpop.permute.xlu0 %2013
          %2017 = vset.pattern.permute.xlu0 0
          %2018 = vperm.xlu0 %2017, %v1876
          %v2019 = vpop.permute.xlu0 %2018
          %2022 = vset.pattern.permute.xlu0 0
          %2023 = vperm.xlu0 %2022, %v1877
          %v2024 = vpop.permute.xlu0 %2023
          %2027 = vset.pattern.permute.xlu0 0
          %2028 = vperm.xlu0 %2027, %v1878
          %v2029 = vpop.permute.xlu0 %2028
          %2032 = vset.pattern.permute.xlu0 0
          %2033 = vperm.xlu0 %2032, %v1879
          %v2034 = vpop.permute.xlu0 %2033
          %2037 = vset.pattern.permute.xlu0 0
          %2038 = vperm.xlu0 %2037, %v1880
          %v2039 = vpop.permute.xlu0 %2038
          %v2041 = vmul.f32 %v1817, %v1884
          %v2042 = vmul.f32 %v1818, %v1889
          %v2043 = vmul.f32 %v1819, %v1894
          %v2044 = vmul.f32 %v1820, %v1899
          %v2045 = vmul.f32 %v1821, %v1904
          %v2046 = vmul.f32 %v1822, %v1909
          %v2047 = vmul.f32 %v1823, %v1914
          %v2048 = vmul.f32 %v1824, %v1919
          %v2049 = vmul.f32 %v1825, %v1924
          %v2050 = vmul.f32 %v1826, %v1929
          %v2051 = vmul.f32 %v1827, %v1934
          %v2052 = vmul.f32 %v1828, %v1939
          %v2053 = vmul.f32 %v1829, %v1944
          %v2054 = vmul.f32 %v1830, %v1949
          %v2055 = vmul.f32 %v1831, %v1954
          %v2056 = vmul.f32 %v1832, %v1959
          %v2057 = vmul.f32 %v1833, %v1964
          %v2058 = vmul.f32 %v1834, %v1969
          %v2059 = vmul.f32 %v1835, %v1974
          %v2060 = vmul.f32 %v1836, %v1979
          %v2061 = vmul.f32 %v1837, %v1984
          %v2062 = vmul.f32 %v1838, %v1989
          %v2063 = vmul.f32 %v1839, %v1994
          %v2064 = vmul.f32 %v1840, %v1999
          %v2065 = vmul.f32 %v1841, %v2004
          %v2066 = vmul.f32 %v1842, %v2009
          %v2067 = vmul.f32 %v1843, %v2014
          %v2068 = vmul.f32 %v1844, %v2019
          %v2069 = vmul.f32 %v1845, %v2024
          %v2070 = vmul.f32 %v1846, %v2029
          %v2071 = vmul.f32 %v1847, %v2034
          %v2072 = vmul.f32 %v1848, %v2039
          %v2073 = vpack.c.bf16 %v2042, %v2041
          %v2074 = vpack.c.bf16 %v2044, %v2043
          %v2075 = vpack.c.bf16 %v2046, %v2045
          %v2076 = vpack.c.bf16 %v2048, %v2047
          %v2077 = vpack.c.bf16 %v2050, %v2049
          %v2078 = vpack.c.bf16 %v2052, %v2051
          %v2079 = vpack.c.bf16 %v2054, %v2053
          %v2080 = vpack.c.bf16 %v2056, %v2055
          %v2081 = vpack.c.bf16 %v2058, %v2057
          %v2082 = vpack.c.bf16 %v2060, %v2059
          %v2083 = vpack.c.bf16 %v2062, %v2061
          %v2084 = vpack.c.bf16 %v2064, %v2063
          %v2085 = vpack.c.bf16 %v2066, %v2065
          %v2086 = vpack.c.bf16 %v2068, %v2067
          %v2087 = vpack.c.bf16 %v2070, %v2069
          %v2088 = vpack.c.bf16 %v2072, %v2071
          %v2089 = vld [vmem:[#allocation6] sm:$0xf]
          %v2090 = vld [vmem:[#allocation6 + $0x4] sm:$0xf]
          %v2091 = vld [vmem:[#allocation6 + $0x8] sm:$0xf]
          %v2092 = vld [vmem:[#allocation6 + $0xc] sm:$0xf]
          %v2093 = vld [vmem:[#allocation6 + $0x10] sm:$0xf]
          %v2094 = vld [vmem:[#allocation6 + $0x14] sm:$0xf]
          %v2095 = vld [vmem:[#allocation6 + $0x18] sm:$0xf]
          %v2096 = vld [vmem:[#allocation6 + $0x1c] sm:$0xf]
          %v2097 = vld [vmem:[#allocation6 + $0x20] sm:$0xf]
          %v2098 = vld [vmem:[#allocation6 + $0x24] sm:$0xf]
          %v2099 = vld [vmem:[#allocation6 + $0x28] sm:$0xf]
          %v2100 = vld [vmem:[#allocation6 + $0x2c] sm:$0xf]
          %v2101 = vld [vmem:[#allocation6 + $0x30] sm:$0xf]
          %v2102 = vld [vmem:[#allocation6 + $0x34] sm:$0xf]
          %v2103 = vld [vmem:[#allocation6 + $0x38] sm:$0xf]
          %v2104 = vld [vmem:[#allocation6 + $0x3c] sm:$0xf]
          %v2105 = vld [vmem:[%s5] sm:$0x1]
          %v2107 = vlaneseq
          %v2108 = vshrl.u32 %v2107, 7
          %v2109 = vsub.s32 0, %v2108
          %v2110 = vrot.slane %v2105, %v2109
          %v2128 = vunpack.c.l.b16 %v2089
          %v2129 = vunpack.c.l.b16 %v2090
          %v2130 = vunpack.c.l.b16 %v2091
          %v2131 = vunpack.c.l.b16 %v2092
          %v2132 = vunpack.c.l.b16 %v2093
          %v2133 = vunpack.c.l.b16 %v2094
          %v2134 = vunpack.c.l.b16 %v2095
          %v2135 = vunpack.c.l.b16 %v2096
          %v2136 = vunpack.c.l.b16 %v2097
          %v2137 = vunpack.c.l.b16 %v2098
          %v2138 = vunpack.c.l.b16 %v2099
          %v2139 = vunpack.c.l.b16 %v2100
          %v2140 = vunpack.c.l.b16 %v2101
          %v2141 = vunpack.c.l.b16 %v2102
          %v2142 = vunpack.c.l.b16 %v2103
          %v2143 = vunpack.c.l.b16 %v2104
          %v2144 = vpack.c.b16 %v2129, %v2128
          %v2145 = vpack.c.b16 %v2131, %v2130
          %v2146 = vpack.c.b16 %v2133, %v2132
          %v2147 = vpack.c.b16 %v2135, %v2134
          %v2148 = vpack.c.b16 %v2137, %v2136
          %v2149 = vpack.c.b16 %v2139, %v2138
          %v2150 = vpack.c.b16 %v2141, %v2140
          %v2151 = vpack.c.b16 %v2143, %v2142
          %2160 = vmatprep.subr.bf16.mxu0 0
          %2161 = vmatpush1.bf16.msra.mxu0 %v2144
          %2162 = vmatprep.subr.bf16.mxu0 0
          %2163 = vmatpush1.bf16.msra.mxu0 %v2145
          %2164 = vmatprep.subr.bf16.mxu0 0
          %2165 = vmatpush1.bf16.msra.mxu0 %v2146
          %2166 = vmatprep.subr.bf16.mxu0 0
          %2167 = vmatpush1.bf16.msra.mxu0 %v2147
          %2168 = vmatprep.subr.bf16.mxu0 0
          %2169 = vmatpush1.bf16.msra.mxu0 %v2148
          %2170 = vmatprep.subr.bf16.mxu0 0
          %2171 = vmatpush1.bf16.msra.mxu0 %v2149
          %2172 = vmatprep.subr.bf16.mxu0 0
          %2173 = vmatpush1.bf16.msra.mxu0 %v2150
          %2174 = vmatprep.subr.bf16.mxu0 0
          %2175 = vmatpush1.bf16.msra.mxu0 %v2151
          %2176 = vmatprep.subr.bf16.mxu0 0
          %2177 = vmatpush1.bf16.msra.mxu0 0
          %2178 = vmatprep.subr.bf16.mxu0 0
          %2179 = vmatpush1.bf16.msra.mxu0 0
          %2180 = vmatprep.subr.bf16.mxu0 0
          %2181 = vmatpush1.bf16.msra.mxu0 0
          %2182 = vmatprep.subr.bf16.mxu0 0
          %2183 = vmatpush1.bf16.msra.mxu0 0
          %2184 = vmatprep.subr.bf16.mxu0 0
          %2185 = vmatpush1.bf16.msra.mxu0 0
          %2186 = vmatprep.subr.bf16.mxu0 0
          %2187 = vmatpush1.bf16.msra.mxu0 0
          %2188 = vmatprep.subr.bf16.mxu0 0
          %2189 = vmatpush1.bf16.msra.mxu0 0
          %2190 = vmatprep.subr.bf16.mxu0 0
          %2191 = vmatpush1.bf16.msra.mxu0 0
          %2192 = vmatprep.mubr.bf16.mxu0 0
          %2193 = vmatmul.mubr.bf16.gmra.mrb[0].mxu0 %v2073
          %v2194 = vpop.f32.mrb[0].mxu0
          %v2195 = vadd.f32 %v2110, %v2194
          %v2196 = vpop.f32.mrb[0].mxu0
          %v2197 = vpop.f32.mrb[0].mxu0
          %v2198 = vadd.f32 %v2110, %v2197
          %v2199 = vpop.f32.mrb[0].mxu0
          %2200 = vmatprep.mubr.bf16.mxu0 0
          %2201 = vmatmul.mubr.bf16.gmra.mrb[0].mxu0 %v2074
          %v2202 = vpop.f32.mrb[0].mxu0
          %v2203 = vadd.f32 %v2110, %v2202
          %v2204 = vpop.f32.mrb[0].mxu0
          %v2205 = vpop.f32.mrb[0].mxu0
          %v2206 = vadd.f32 %v2110, %v2205
          %v2207 = vpop.f32.mrb[0].mxu0
          %2208 = vmatprep.mubr.bf16.mxu0 0
          %2209 = vmatmul.mubr.bf16.gmra.mrb[0].mxu0 %v2075
          %v2210 = vpop.f32.mrb[0].mxu0
          %v2211 = vadd.f32 %v2110, %v2210
          %v2212 = vpop.f32.mrb[0].mxu0
          %v2213 = vpop.f32.mrb[0].mxu0
          %v2214 = vadd.f32 %v2110, %v2213
          %v2215 = vpop.f32.mrb[0].mxu0
          %2216 = vmatprep.mubr.bf16.mxu0 0
          %2217 = vmatmul.mubr.bf16.gmra.mrb[0].mxu0 %v2076
          %v2218 = vpop.f32.mrb[0].mxu0
          %v2219 = vadd.f32 %v2110, %v2218
          %v2220 = vpop.f32.mrb[0].mxu0
          %v2221 = vpop.f32.mrb[0].mxu0
          %v2222 = vadd.f32 %v2110, %v2221
          %v2223 = vpop.f32.mrb[0].mxu0
          %2224 = vmatprep.mubr.bf16.mxu0 0
          %2225 = vmatmul.mubr.bf16.gmra.mrb[0].mxu0 %v2077
          %v2226 = vpop.f32.mrb[0].mxu0
          %v2227 = vadd.f32 %v2110, %v2226
          %v2228 = vpop.f32.mrb[0].mxu0
          %v2229 = vpop.f32.mrb[0].mxu0
          %v2230 = vadd.f32 %v2110, %v2229
          %v2231 = vpop.f32.mrb[0].mxu0
          %2232 = vmatprep.mubr.bf16.mxu0 0
          %2233 = vmatmul.mubr.bf16.gmra.mrb[0].mxu0 %v2078
          %v2234 = vpop.f32.mrb[0].mxu0
          %v2235 = vadd.f32 %v2110, %v2234
          %v2236 = vpop.f32.mrb[0].mxu0
          %v2237 = vpop.f32.mrb[0].mxu0
          %v2238 = vadd.f32 %v2110, %v2237
          %v2239 = vpop.f32.mrb[0].mxu0
          %2240 = vmatprep.mubr.bf16.mxu0 0
          %2241 = vmatmul.mubr.bf16.gmra.mrb[0].mxu0 %v2079
          %v2242 = vpop.f32.mrb[0].mxu0
          %v2243 = vadd.f32 %v2110, %v2242
          %v2244 = vpop.f32.mrb[0].mxu0
          %v2245 = vpop.f32.mrb[0].mxu0
          %v2246 = vadd.f32 %v2110, %v2245
          %v2247 = vpop.f32.mrb[0].mxu0
          %2248 = vmatprep.mubr.bf16.mxu0 0
          %2249 = vmatmul.mubr.bf16.gmra.mrb[0].mxu0 %v2080
          %v2250 = vpop.f32.mrb[0].mxu0
          %v2251 = vadd.f32 %v2110, %v2250
          %v2252 = vpop.f32.mrb[0].mxu0
          %v2253 = vpop.f32.mrb[0].mxu0
          %v2254 = vadd.f32 %v2110, %v2253
          %v2255 = vpop.f32.mrb[0].mxu0
          %2256 = vmatprep.mubr.bf16.mxu0 0
          %2257 = vmatmul.mubr.bf16.gmra.mrb[0].mxu0 %v2081
          %v2258 = vpop.f32.mrb[0].mxu0
          %v2259 = vadd.f32 %v2110, %v2258
          %v2260 = vpop.f32.mrb[0].mxu0
          %v2261 = vpop.f32.mrb[0].mxu0
          %v2262 = vadd.f32 %v2110, %v2261
          %v2263 = vpop.f32.mrb[0].mxu0
          %2264 = vmatprep.mubr.bf16.mxu0 0
          %2265 = vmatmul.mubr.bf16.gmra.mrb[0].mxu0 %v2082
          %v2266 = vpop.f32.mrb[0].mxu0
          %v2267 = vadd.f32 %v2110, %v2266
          %v2268 = vpop.f32.mrb[0].mxu0
          %v2269 = vpop.f32.mrb[0].mxu0
          %v2270 = vadd.f32 %v2110, %v2269
          %v2271 = vpop.f32.mrb[0].mxu0
          %2272 = vmatprep.mubr.bf16.mxu0 0
          %2273 = vmatmul.mubr.bf16.gmra.mrb[0].mxu0 %v2083
          %v2274 = vpop.f32.mrb[0].mxu0
          %v2275 = vadd.f32 %v2110, %v2274
          %v2276 = vpop.f32.mrb[0].mxu0
          %v2277 = vpop.f32.mrb[0].mxu0
          %v2278 = vadd.f32 %v2110, %v2277
          %v2279 = vpop.f32.mrb[0].mxu0
          %2280 = vmatprep.mubr.bf16.mxu0 0
          %2281 = vmatmul.mubr.bf16.gmra.mrb[0].mxu0 %v2084
          %v2282 = vpop.f32.mrb[0].mxu0
          %v2283 = vadd.f32 %v2110, %v2282
          %v2284 = vpop.f32.mrb[0].mxu0
          %v2285 = vpop.f32.mrb[0].mxu0
          %v2286 = vadd.f32 %v2110, %v2285
          %v2287 = vpop.f32.mrb[0].mxu0
          %2288 = vmatprep.mubr.bf16.mxu0 0
          %2289 = vmatmul.mubr.bf16.gmra.mrb[0].mxu0 %v2085
          %v2290 = vpop.f32.mrb[0].mxu0
          %v2291 = vadd.f32 %v2110, %v2290
          %v2292 = vpop.f32.mrb[0].mxu0
          %v2293 = vpop.f32.mrb[0].mxu0
          %v2294 = vadd.f32 %v2110, %v2293
          %v2295 = vpop.f32.mrb[0].mxu0
          %2296 = vmatprep.mubr.bf16.mxu0 0
          %2297 = vmatmul.mubr.bf16.gmra.mrb[0].mxu0 %v2086
          %v2298 = vpop.f32.mrb[0].mxu0
          %v2299 = vadd.f32 %v2110, %v2298
          %v2300 = vpop.f32.mrb[0].mxu0
          %v2301 = vpop.f32.mrb[0].mxu0
          %v2302 = vadd.f32 %v2110, %v2301
          %v2303 = vpop.f32.mrb[0].mxu0
          %2304 = vmatprep.mubr.bf16.mxu0 0
          %2305 = vmatmul.mubr.bf16.gmra.mrb[0].mxu0 %v2087
          %v2306 = vpop.f32.mrb[0].mxu0
          %v2307 = vadd.f32 %v2110, %v2306
          %v2308 = vpop.f32.mrb[0].mxu0
          %v2309 = vpop.f32.mrb[0].mxu0
          %v2310 = vadd.f32 %v2110, %v2309
          %v2311 = vpop.f32.mrb[0].mxu0
          %2312 = vmatprep.mubr.bf16.mxu0 0
          %2313 = vmatmul.mubr.bf16.gmra.mrb[0].mxu0 %v2088
          %v2314 = vpop.f32.mrb[0].mxu0
          %v2315 = vadd.f32 %v2110, %v2314
          %v2316 = vpop.f32.mrb[0].mxu0
          %v2317 = vpop.f32.mrb[0].mxu0
          %v2318 = vadd.f32 %v2110, %v2317
          %v2319 = vpop.f32.mrb[0].mxu0
          %2320 = vdwg.mxu0
          %v2321 = vmax.f32 %v2195, 0.0
          %v2322 = vmax.f32 %v2198, 0.0
          %v2323 = vmax.f32 %v2203, 0.0
          %v2324 = vmax.f32 %v2206, 0.0
          %v2325 = vmax.f32 %v2211, 0.0
          %v2326 = vmax.f32 %v2214, 0.0
          %v2327 = vmax.f32 %v2219, 0.0
          %v2328 = vmax.f32 %v2222, 0.0
          %v2329 = vmax.f32 %v2227, 0.0
          %v2330 = vmax.f32 %v2230, 0.0
          %v2331 = vmax.f32 %v2235, 0.0
          %v2332 = vmax.f32 %v2238, 0.0
          %v2333 = vmax.f32 %v2243, 0.0
          %v2334 = vmax.f32 %v2246, 0.0
          %v2335 = vmax.f32 %v2251, 0.0
          %v2336 = vmax.f32 %v2254, 0.0
          %v2337 = vmax.f32 %v2259, 0.0
          %v2338 = vmax.f32 %v2262, 0.0
          %v2339 = vmax.f32 %v2267, 0.0
          %v2340 = vmax.f32 %v2270, 0.0
          %v2341 = vmax.f32 %v2275, 0.0
          %v2342 = vmax.f32 %v2278, 0.0
          %v2343 = vmax.f32 %v2283, 0.0
          %v2344 = vmax.f32 %v2286, 0.0
          %v2345 = vmax.f32 %v2291, 0.0
          %v2346 = vmax.f32 %v2294, 0.0
          %v2347 = vmax.f32 %v2299, 0.0
          %v2348 = vmax.f32 %v2302, 0.0
          %v2349 = vmax.f32 %v2307, 0.0
          %v2350 = vmax.f32 %v2310, 0.0
          %v2351 = vmax.f32 %v2315, 0.0
          %v2352 = vmax.f32 %v2318, 0.0
          %v2353 = vpack.c.bf16 %v2322, %v2321
          %v2354 = vpack.c.bf16 %v2324, %v2323
          %v2355 = vpack.c.bf16 %v2326, %v2325
          %v2356 = vpack.c.bf16 %v2328, %v2327
          %v2357 = vpack.c.bf16 %v2330, %v2329
          %v2358 = vpack.c.bf16 %v2332, %v2331
          %v2359 = vpack.c.bf16 %v2334, %v2333
          %v2360 = vpack.c.bf16 %v2336, %v2335
          %v2361 = vpack.c.bf16 %v2338, %v2337
          %v2362 = vpack.c.bf16 %v2340, %v2339
          %v2363 = vpack.c.bf16 %v2342, %v2341
          %v2364 = vpack.c.bf16 %v2344, %v2343
          %v2365 = vpack.c.bf16 %v2346, %v2345
          %v2366 = vpack.c.bf16 %v2348, %v2347
          %v2367 = vpack.c.bf16 %v2350, %v2349
          %v2368 = vpack.c.bf16 %v2352, %v2351
          %v2385 = vunpack.c.l.b16 %v2353
          %v2386 = vunpack.c.h.b16 %v2353
          %v2387 = vunpack.c.l.b16 %v2354
          %v2388 = vunpack.c.h.b16 %v2354
          %v2389 = vunpack.c.l.b16 %v2355
          %v2390 = vunpack.c.h.b16 %v2355
          %v2391 = vunpack.c.l.b16 %v2356
          %v2392 = vunpack.c.h.b16 %v2356
          %v2393 = vunpack.c.l.b16 %v2357
          %v2394 = vunpack.c.h.b16 %v2357
          %v2395 = vunpack.c.l.b16 %v2358
          %v2396 = vunpack.c.h.b16 %v2358
          %v2397 = vunpack.c.l.b16 %v2359
          %v2398 = vunpack.c.h.b16 %v2359
          %v2399 = vunpack.c.l.b16 %v2360
          %v2400 = vunpack.c.h.b16 %v2360
          %v2401 = vunpack.c.l.b16 %v2361
          %v2402 = vunpack.c.h.b16 %v2361
          %v2403 = vunpack.c.l.b16 %v2362
          %v2404 = vunpack.c.h.b16 %v2362
          %v2405 = vunpack.c.l.b16 %v2363
          %v2406 = vunpack.c.h.b16 %v2363
          %v2407 = vunpack.c.l.b16 %v2364
          %v2408 = vunpack.c.h.b16 %v2364
          %v2409 = vunpack.c.l.b16 %v2365
          %v2410 = vunpack.c.h.b16 %v2365
          %v2411 = vunpack.c.l.b16 %v2366
          %v2412 = vunpack.c.h.b16 %v2366
          %v2413 = vunpack.c.l.b16 %v2367
          %v2414 = vunpack.c.h.b16 %v2367
          %v2415 = vunpack.c.l.b16 %v2368
          %v2416 = vunpack.c.h.b16 %v2368
          %v2417 = vpack.c.b16 %v2385, %v2385
          %v2418 = vpack.c.b16 %v2386, %v2386
          %v2419 = vpack.c.b16 %v2387, %v2387
          %v2420 = vpack.c.b16 %v2388, %v2388
          %v2421 = vpack.c.b16 %v2389, %v2389
          %v2422 = vpack.c.b16 %v2390, %v2390
          %v2423 = vpack.c.b16 %v2391, %v2391
          %v2424 = vpack.c.b16 %v2392, %v2392
          %v2425 = vpack.c.b16 %v2393, %v2393
          %v2426 = vpack.c.b16 %v2394, %v2394
          %v2427 = vpack.c.b16 %v2395, %v2395
          %v2428 = vpack.c.b16 %v2396, %v2396
          %v2429 = vpack.c.b16 %v2397, %v2397
          %v2430 = vpack.c.b16 %v2398, %v2398
          %v2431 = vpack.c.b16 %v2399, %v2399
          %v2432 = vpack.c.b16 %v2400, %v2400
          %v2433 = vpack.c.b16 %v2401, %v2401
          %v2434 = vpack.c.b16 %v2402, %v2402
          %v2435 = vpack.c.b16 %v2403, %v2403
          %v2436 = vpack.c.b16 %v2404, %v2404
          %v2437 = vpack.c.b16 %v2405, %v2405
          %v2438 = vpack.c.b16 %v2406, %v2406
          %v2439 = vpack.c.b16 %v2407, %v2407
          %v2440 = vpack.c.b16 %v2408, %v2408
          %v2441 = vpack.c.b16 %v2409, %v2409
          %v2442 = vpack.c.b16 %v2410, %v2410
          %v2443 = vpack.c.b16 %v2411, %v2411
          %v2444 = vpack.c.b16 %v2412, %v2412
          %v2445 = vpack.c.b16 %v2413, %v2413
          %v2446 = vpack.c.b16 %v2414, %v2414
          %v2447 = vpack.c.b16 %v2415, %v2415
          %v2448 = vpack.c.b16 %v2416, %v2416
          %2481 = vst [vmem:[%s340] sm:$0xf] %v2417
          %2482 = vst [vmem:[%s340 + $0x4] sm:$0xf] %v2418
          %2483 = vst [vmem:[%s340 + $0x8] sm:$0xf] %v2419
          %2484 = vst [vmem:[%s340 + $0xc] sm:$0xf] %v2420
          %2485 = vst [vmem:[%s340 + $0x10] sm:$0xf] %v2421
          %2486 = vst [vmem:[%s340 + $0x14] sm:$0xf] %v2422
          %2487 = vst [vmem:[%s340 + $0x18] sm:$0xf] %v2423
          %2488 = vst [vmem:[%s340 + $0x1c] sm:$0xf] %v2424
          %2489 = vst [vmem:[%s340 + $0x20] sm:$0xf] %v2425
          %2490 = vst [vmem:[%s340 + $0x24] sm:$0xf] %v2426
          %2491 = vst [vmem:[%s340 + $0x28] sm:$0xf] %v2427
          %2492 = vst [vmem:[%s340 + $0x2c] sm:$0xf] %v2428
          %2493 = vst [vmem:[%s340 + $0x30] sm:$0xf] %v2429
          %2494 = vst [vmem:[%s340 + $0x34] sm:$0xf] %v2430
          %2495 = vst [vmem:[%s340 + $0x38] sm:$0xf] %v2431
          %2496 = vst [vmem:[%s340 + $0x3c] sm:$0xf] %v2432
          %2497 = vst [vmem:[%s340 + $0x40] sm:$0xf] %v2433
          %2498 = vst [vmem:[%s340 + $0x44] sm:$0xf] %v2434
          %2499 = vst [vmem:[%s340 + $0x48] sm:$0xf] %v2435
          %2500 = vst [vmem:[%s340 + $0x4c] sm:$0xf] %v2436
          %2501 = vst [vmem:[%s340 + $0x50] sm:$0xf] %v2437
          %2502 = vst [vmem:[%s340 + $0x54] sm:$0xf] %v2438
          %2503 = vst [vmem:[%s340 + $0x58] sm:$0xf] %v2439
          %2504 = vst [vmem:[%s340 + $0x5c] sm:$0xf] %v2440
          %2505 = vst [vmem:[%s340 + $0x60] sm:$0xf] %v2441
          %2506 = vst [vmem:[%s340 + $0x64] sm:$0xf] %v2442
          %2507 = vst [vmem:[%s340 + $0x68] sm:$0xf] %v2443
          %2508 = vst [vmem:[%s340 + $0x6c] sm:$0xf] %v2444
          %2509 = vst [vmem:[%s340 + $0x70] sm:$0xf] %v2445
          %2510 = vst [vmem:[%s340 + $0x74] sm:$0xf] %v2446
          %2511 = vst [vmem:[%s340 + $0x78] sm:$0xf] %v2447
          %2512 = vst [vmem:[%s340 + $0x7c] sm:$0xf] %v2448
        $region60: #{tpu_custom_call.1} parent=43 // pred_fallthru
          _
        %s2513 = sand.u32 %s190, 1
        %s2514 = scalar_lea.sflag [#allocation5], %s2513
        %s2515 = sand.u32 %s190, 1
        %s2516 = smul.addr %s2515, 128
        %s2517 = scalar_lea.vmem [#allocation8], %s2516
        // Predicated region
        $region61: #{tpu_custom_call.1} parent=43 // pred_check
          %p2518 = pneg %p200
        $region62: #{tpu_custom_call.1} parent=43 // pred_check_branch
          %2520 = sbr.rel (%p2518) target = $region64
        $region63: #{tpu_custom_call.1} parent=43 // pred_region
          %s2521 = smul.u32 32, %s26
          %s2523 = ssub.s32 2048, 2048
          %2524 = vsyncadd %s2514, %s2523
          %s2525 = smul.addr %s2521, 64
          %s2526 = scalar_lea.hbm %s6, %s2525
          %s2527 = sshll.u32 %s2517, 4
          %s2528 = int_to_ptr.vmem [resolvable:$true] %s2527
          %2533 = dma.vmem_to_hbm [thread:$0]  %s2528, 2048, %s2526, %s2514, 64, 64, 4
        $region64: #{tpu_custom_call.1} parent=43 // pred_fallthru
          _
      $region44: #{tpu_custom_call.1} parent=5 // pred_fallthru
        _
      %p2534 = scmp.le.s32.totalorder 2, %s17
      // Predicated region
      $region65: #{tpu_custom_call.1} parent=5 // pred_check
        %p2535 = pneg %p2534
      $region66: #{tpu_custom_call.1} parent=5 // pred_check_branch
        %2537 = sbr.rel (%p2535) target = $region68
      $region67: #{tpu_custom_call.1} parent=5 // pred_region
        %s2538 = ssub.s32 %s17, 2
        // Predicated region
        $region69: #{tpu_custom_call.1} parent=67 // pred_check
          %p2539 = pneg %p206
        $region70: #{tpu_custom_call.1} parent=67 // pred_check_branch
          %2541 = sbr.rel (%p2539) target = $region72
        $region71: #{tpu_custom_call.1} parent=67 // pred_region
          %s2542 = sand.u32 %s191, 1
          %s2543 = scalar_lea.sflag [#allocation5], %s2542
          %s2544 = sand.u32 %s191, 1
          %s2545 = smul.addr %s2544, 128
          %s2546 = scalar_lea.vmem [#allocation8], %s2545
          %2547 = dma.done %s2543, 2048
        $region72: #{tpu_custom_call.1} parent=67 // pred_fallthru
          _
      $region68: #{tpu_custom_call.1} parent=5 // pred_fallthru
        _
    $region6: #{tpu_custom_call.1} parent=1 // loop_footer
      %s21 = sadd.s32 1, %s17
    $region7: #{tpu_custom_call.1} parent=1 // loop_footer_branch
      %16 = sbr.rel target = $region3
    $region8: #{tpu_custom_call.1} parent=1 // loop_exit
      _
    %2548 = vsyncpa [#allocation4], 1
    %s2549 = scalar_lea.sflag [#allocation4], 1
    %2550 = vsyncpa %s2549, 1
    %2551 = vsyncpa [#allocation7], 1
    %2552 = vsyncpa [#allocation5], 1
    %s2553 = scalar_lea.sflag [#allocation5], 1
    %2554 = vsyncpa %s2553, 1

</llo_original>
